<compile_context>
chip_gen: v7x
topology: tpu7x:2x2x1
jax: 0.10.0
libtpu: 0.0.40
codegen_flags: <defaults>
</compile_context>

<pallas_src>
import functools

import jax
import jax.numpy as jnp
from jax import lax
from jax.experimental import pallas as pl
from jax.experimental.pallas import tpu as pltpu


# ----------------------------------------------------------------------------
# Pallas kernel: one grid program per group of Nb batch images (images are
# fully independent once BN is folded).  Everything (1x1 conv, 6x [3x3 conv +
# BN + ReLU], residual add) happens inside the kernel.
# ----------------------------------------------------------------------------
def _rrcnn_kernel(xp_ref, m1_ref, b1_ref,
                  m3a_ref, ta_ref,
                  m3b_ref, tb_ref,
                  out_ref, y0_ref, *, H, t):
    rows, wco = out_ref.shape                          # rows = Nb * H

    # 1x1 conv -> block-diagonal lane matmul (bf16 in, f32 accumulate) + bias.
    y0 = jnp.dot(xp_ref[...], m1_ref[...],
                 preferred_element_type=jnp.float32) + b1_ref[...]
    # Park y0 in VMEM: it is only needed again for the final residual, so it
    # does not stay register-resident across the six 3x3 convs.
    y0_ref[...] = y0

    def conv3x3_bn_relu(inp, m3_ref, shift_ref):
        # Vertical taps via K-stacking:
        #   out[r] = a[r-1] @ M0 + a[r] @ M1 + a[r+1] @ M2   (zero at borders)
        # Row-ids are regenerated per conv (a couple of VPU ops) instead of
        # keeping full-tile masks alive.  Roll + mask happen on the f32 data
        # (v5e has no bf16 VALU), then one cast feeds a single
        # (rows, 3*wco) @ (3*wco, wco) MXU pass that also sums the taps.
        yimg = lax.broadcasted_iota(jnp.int32, (rows, wco), 0) % H
        up = jnp.where(yimg != 0,
                       pltpu.roll(inp, shift=1, axis=0), 0.0)        # a[r-1]
        dn = jnp.where(yimg != H - 1,
                       pltpu.roll(inp, shift=rows - 1, axis=0), 0.0)  # a[r+1]
        lhs = jnp.concatenate([up, inp, dn], axis=1).astype(jnp.bfloat16)
        acc = jnp.dot(lhs, m3_ref[...], preferred_element_type=jnp.float32)
        # (1, wco) folded BN shift broadcasts across sublanes in the add; no
        # materialized (rows, wco) broadcast.
        return jnp.maximum(acc + shift_ref[...], 0.0)

    def recurrent_block(xin, m3_ref, shift_ref):
        x1 = conv3x3_bn_relu(xin, m3_ref, shift_ref)
        for _ in range(t):   # t=2; switch to lax.fori_loop(unroll=True) if t grows
            x1 = conv3x3_bn_relu(xin + x1, m3_ref, shift_ref)
        return x1

    ya = recurrent_block(y0, m3a_ref, ta_ref)
    yb = recurrent_block(ya, m3b_ref, tb_ref)

    # Residual add: reload y0 from VMEM scratch (cheap vld, vld slots have slack).
    out_ref[...] = (y0_ref[...] + yb).astype(out_ref.dtype)


# ----------------------------------------------------------------------------
# Wrapper: pack weights into banded lane matrices (glue), call the kernel.
# ----------------------------------------------------------------------------
def rrcnn_pallas(x_nchw, w1, b1, pA, pB, *, eps=1e-5, t=2, rows_target=512):
    N, CI, H, W = x_nchw.shape
    CO = w1.shape[0]
    WCI, WCO = W * CI, W * CO

    # Images per program: largest divisor Nb of N with Nb*H <= rows_target,
    # constrained so G = N // Nb >= 2 (when N >= 2) — the "parallel" grid axis
    # is what shards work across v7x's two TensorCores.  rows >= 128 fills the
    # v5e MXU; 256-512 fills v6e/v7x.
    min_g = 2 if N >= 2 else 1
    Nb = 1
    for d in range(1, N + 1):
        if N % d == 0 and d * H <= max(rows_target, H) and (N // d) >= min_g:
            Nb = d
    G = N // Nb
    rows = Nb * H

    # NCHW -> packed (N*H, W*CI) bf16 matmul operand (halves DMA bytes).
    # TODO(synk): when chaining RRCNN blocks keep activations in this packed
    #             layout between blocks instead of round-tripping through NCHW.
    xp = jnp.transpose(x_nchw, (0, 2, 3, 1)).reshape(N * H, WCI)
    xp = xp.astype(jnp.bfloat16)

    # 1x1 conv as block-diagonal (W*CI, W*CO) matrix, bf16.
    M1 = jnp.kron(jnp.eye(W, dtype=jnp.float32), w1[:, :, 0, 0].T)
    M1 = M1.astype(jnp.bfloat16)
    b1p = jnp.tile(b1, W)[None, :].astype(jnp.float32)

    def pack_block(p):
        scale = p['gamma'] / jnp.sqrt(p['var'] + eps)
        shift = scale * (p['b'] - p['mean']) + p['beta']   # conv bias folded in
        scale_l = jnp.tile(scale, W)[None, :]
        mats = []
        for dy in range(3):
            m = jnp.zeros((WCO, WCO), jnp.float32)
            for kw in range(3):
                # input column w_in = w_out + kw - 1 (zero outside [0, W))
                S = jnp.eye(W, k=-(kw - 1), dtype=jnp.float32)
                m = m + jnp.kron(S, p['w'][:, :, dy, kw].T)
            # fold BN scale into the output columns -> free inside the MXU
            mats.append(m * scale_l)
        # K-stacked RHS (3*WCO, WCO): one matmul sums the three vertical taps.
        M3 = jnp.concatenate(mats, axis=0).astype(jnp.bfloat16)
        return M3, jnp.tile(shift, W)[None, :].astype(jnp.float32)

    M3a, ta = pack_block(pA)
    M3b, tb = pack_block(pB)

    kern = functools.partial(_rrcnn_kernel, H=H, t=t)

    def const_spec(shape):
        # NOTE: these operands never change across grid steps; if W*CO or
        # rows_target is scaled up, single-buffer them with
        # pipeline_mode=pl.Buffered(1) to halve their VMEM footprint
        # (irrelevant at WCO=128, <1 MiB total).
        return pl.BlockSpec(shape, lambda g: (0, 0))

    outp = pl.pallas_call(
        kern,
        out_shape=jax.ShapeDtypeStruct((N * H, WCO), jnp.bfloat16),
        grid_spec=pltpu.PrefetchScalarGridSpec(
            num_scalar_prefetch=0,
            grid=(G,),
            in_specs=[
                pl.BlockSpec((rows, WCI), lambda g: (g, 0)),
                const_spec((WCI, WCO)),
                const_spec((1, WCO)),
                const_spec((3 * WCO, WCO)),
                const_spec((1, WCO)),
                const_spec((3 * WCO, WCO)),
                const_spec((1, WCO)),
            ],
            out_specs=pl.BlockSpec((rows, WCO), lambda g: (g, 0)),
            scratch_shapes=[pltpu.VMEM((rows, WCO), jnp.float32)],   # y0 park
        ),
        compiler_params=pltpu.CompilerParams(
            dimension_semantics=("parallel",)),
    )(xp, M1, b1p, M3a, ta, M3b, tb)

    # packed (N*H, W*CO) bf16 -> NCHW f32 (cast fused into the unpack transpose)
    return jnp.transpose(outp.reshape(N, H, W, CO), (0, 3, 1, 2)).astype(jnp.float32)


# ----------------------------------------------------------------------------
# Plain-JAX reference (same eval-mode BN semantics) for validation.
# ----------------------------------------------------------------------------
def _conv2d(x, w, b, pad):
    y = lax.conv_general_dilated(
        x, w, window_strides=(1, 1), padding=[(pad, pad), (pad, pad)],
        dimension_numbers=('NCHW', 'OIHW', 'NCHW'),
        precision=lax.Precision.HIGHEST)
    return y + b[None, :, None, None]


def rrcnn_reference(x, w1, b1, pA, pB, *, eps=1e-5, t=2):
    def cbr(z, p):
        y = _conv2d(z, p['w'], p['b'], 1)
        y = (p['gamma'][None, :, None, None]
             * (y - p['mean'][None, :, None, None])
             / jnp.sqrt(p['var'] + eps)[None, :, None, None]
             + p['beta'][None, :, None, None])
        return jnp.maximum(y, 0.0)

    def rec(z, p):
        x1 = cbr(z, p)
        for _ in range(t):
            x1 = cbr(z + x1, p)
        return x1

    x0 = _conv2d(x, w1, b1, 0)
    return x0 + rec(rec(x0, pA), pB)


# ----------------------------------------------------------------------------
if __name__ == "__main__":
    N, CI, CO, H, W, t = 2, 4, 8, 16, 16, 2

    key = jax.random.PRNGKey(0)
    ks = jax.random.split(key, 8)

    w1 = 0.3 * jax.random.normal(ks[0], (CO, CI, 1, 1), jnp.float32)
    b1 = 0.1 * jax.random.normal(ks[1], (CO,), jnp.float32)

    def make_block_params(k):
        kk = jax.random.split(k, 6)
        return dict(
            w=0.15 * jax.random.normal(kk[0], (CO, CO, 3, 3), jnp.float32),
            b=0.1 * jax.random.normal(kk[1], (CO,), jnp.float32),
            gamma=1.0 + 0.2 * jax.random.normal(kk[2], (CO,), jnp.float32),
            beta=0.1 * jax.random.normal(kk[3], (CO,), jnp.float32),
            mean=0.1 * jax.random.normal(kk[4], (CO,), jnp.float32),
            var=jax.random.uniform(kk[5], (CO,), jnp.float32, 0.5, 1.5),
        )

    pA = make_block_params(ks[2])
    pB = make_block_params(ks[3])

    x = jax.random.normal(ks[4], (N, CI, H, W), jnp.float32)

    out = rrcnn_pallas(x, w1, b1, pA, pB, t=t)
    out = jax.block_until_ready(out)

    ref = rrcnn_reference(x, w1, b1, pA, pB, t=t)
    assert out.shape == ref.shape == (N, CO, H, W)
    max_err = float(jnp.max(jnp.abs(out - ref)))
    # bf16 matmul operands + bf16 HBM writeback with f32 accumulation
    # -> loosened tolerance.
    assert jnp.allclose(out, ref, rtol=5e-2, atol=5e-2), f"max_err={max_err}"

    print("KERNEL_OK")
</pallas_src>

<mosaic_0001>
module attributes {stable_mosaic.version = 11 : i64} {
  func.func @_rrcnn_kernel(%arg0: i32, %arg1: memref<16x64xbf16, #tpu.memory_space<vmem>>, %arg2: memref<64x128xbf16, #tpu.memory_space<vmem>>, %arg3: memref<1x128xf32, #tpu.memory_space<vmem>>, %arg4: memref<384x128xbf16, #tpu.memory_space<vmem>>, %arg5: memref<1x128xf32, #tpu.memory_space<vmem>>, %arg6: memref<384x128xbf16, #tpu.memory_space<vmem>>, %arg7: memref<1x128xf32, #tpu.memory_space<vmem>>, %arg8: memref<16x128xbf16, #tpu.memory_space<vmem>>, %arg9: memref<16x128xf32, #tpu.memory_space<vmem>>) attributes {dimension_semantics = [#tpu.dimension_semantics<parallel>], iteration_bounds = array<i64: 2>, scalar_prefetch = 0 : i64, scratch_operands = 1 : i64, tpu.core_type = #tpu.core_type<tc>, window_params = [{transform_indices = @transform_0, window_bounds = array<i64: 16, 64>}, {pipeline_mode = #tpu.pipeline_mode<synchronous>, transform_indices = @transform_1, window_bounds = array<i64: 64, 128>}, {pipeline_mode = #tpu.pipeline_mode<synchronous>, transform_indices = @transform_2, window_bounds = array<i64: 1, 128>}, {pipeline_mode = #tpu.pipeline_mode<synchronous>, transform_indices = @transform_3, window_bounds = array<i64: 384, 128>}, {pipeline_mode = #tpu.pipeline_mode<synchronous>, transform_indices = @transform_4, window_bounds = array<i64: 1, 128>}, {pipeline_mode = #tpu.pipeline_mode<synchronous>, transform_indices = @transform_5, window_bounds = array<i64: 384, 128>}, {pipeline_mode = #tpu.pipeline_mode<synchronous>, transform_indices = @transform_6, window_bounds = array<i64: 1, 128>}, {transform_indices = @transform_7, window_bounds = array<i64: 16, 128>}]} {
    %c0 = arith.constant 0 : index
    %c0_0 = arith.constant 0 : index
    %0 = vector.load %arg1[%c0, %c0_0] : memref<16x64xbf16, #tpu.memory_space<vmem>>, vector<16x64xbf16>
    %c0_1 = arith.constant 0 : index
    %c0_2 = arith.constant 0 : index
    %1 = vector.load %arg2[%c0_1, %c0_2] : memref<64x128xbf16, #tpu.memory_space<vmem>>, vector<64x128xbf16>
    %cst = arith.constant dense<0.000000e+00> : vector<16x128xf32>
    %2 = tpu.matmul %0, %1, %cst {dimension_numbers = #tpu.dot_dimension_numbers<[1], [0], [0], [1], [0, 0, 1, 1], [], []>} : vector<16x64xbf16>, vector<64x128xbf16>, vector<16x128xf32> -> vector<16x128xf32>
    %c0_3 = arith.constant 0 : index
    %c0_4 = arith.constant 0 : index
    %3 = vector.load %arg3[%c0_3, %c0_4] : memref<1x128xf32, #tpu.memory_space<vmem>>, vector<1x128xf32>
    %4 = vector.broadcast %3 : vector<1x128xf32> to vector<16x128xf32>
    %5 = arith.addf %2, %4 : vector<16x128xf32>
    %c0_5 = arith.constant 0 : index
    %c0_6 = arith.constant 0 : index
    %6 = vector.load %arg9[%c0_5, %c0_6] : memref<16x128xf32, #tpu.memory_space<vmem>>, vector<16x128xf32>
    tpu.vector_store %arg9[%c0_5, %c0_6], %5 {strides = array<i32>} : memref<16x128xf32, #tpu.memory_space<vmem>>, vector<16x128xf32>,
    %7 = tpu.iota {dimensions = array<i32: 0>} : vector<16x128xi32>
    %c16_i32 = arith.constant 16 : i32
    %c0_i32 = arith.constant 0 : i32
    %8 = arith.cmpi eq, %c16_i32, %c0_i32 : i32
    %c1_i32 = arith.constant 1 : i32
    %9 = arith.select %8, %c1_i32, %c16_i32 : i32
    %10 = vector.broadcast %9 : i32 to vector<16x128xi32>
    %11 = arith.remsi %7, %10 : vector<16x128xi32>
    %c0_i32_7 = arith.constant 0 : i32
    %12 = vector.broadcast %c0_i32_7 : i32 to vector<16x128xi32>
    %13 = arith.cmpi ne, %11, %12 : vector<16x128xi32>
    %c0_i32_8 = arith.constant 0 : i32
    %14 = vector.broadcast %c0_i32_8 : i32 to vector<16x128xi32>
    %15 = arith.cmpi slt, %11, %14 : vector<16x128xi32>
    %c0_i32_9 = arith.constant 0 : i32
    %16 = arith.cmpi slt, %9, %c0_i32_9 : i32
    %17 = vector.broadcast %16 : i1 to vector<16x128xi1>
    %18 = vector.broadcast %17 : vector<16x128xi1> to vector<16x128xi1>
    %19 = arith.xori %15, %18 : vector<16x128xi1>
    %20 = arith.andi %19, %13 : vector<16x128xi1>
    %21 = vector.broadcast %9 : i32 to vector<16x128xi32>
    %22 = arith.addi %11, %21 : vector<16x128xi32>
    %23 = arith.select %20, %22, %11 : vector<16x128xi1>, vector<16x128xi32>
    %c0_i32_10 = arith.constant 0 : i32
    %24 = vector.broadcast %c0_i32_10 : i32 to vector<16x128xi32>
    %25 = arith.cmpi ne, %23, %24 : vector<16x128xi32>
    %c1_i32_11 = arith.constant 1 : i32
    %26 = tpu.dynamic_rotate %5 by %c1_i32_11 dim 0 : vector<16x128xf32>, i32 -> vector<16x128xf32>
    %cst_12 = arith.constant 0.000000e+00 : f32
    %27 = vector.broadcast %cst_12 : f32 to vector<16x128xf32>
    %28 = arith.select %25, %26, %27 : vector<16x128xi1>, vector<16x128xf32>
    %c15_i32 = arith.constant 15 : i32
    %29 = vector.broadcast %c15_i32 : i32 to vector<16x128xi32>
    %30 = arith.cmpi ne, %23, %29 : vector<16x128xi32>
    %c15_i32_13 = arith.constant 15 : i32
    %31 = tpu.dynamic_rotate %5 by %c15_i32_13 dim 0 : vector<16x128xf32>, i32 -> vector<16x128xf32>
    %cst_14 = arith.constant 0.000000e+00 : f32
    %32 = vector.broadcast %cst_14 : f32 to vector<16x128xf32>
    %33 = arith.select %30, %31, %32 : vector<16x128xi1>, vector<16x128xf32>
    %34 = tpu.concatenate %28, %5, %33 in 1 : vector<16x128xf32>, vector<16x128xf32>, vector<16x128xf32> -> vector<16x384xf32>
    %35 = arith.truncf %34 : vector<16x384xf32> to vector<16x384xbf16>
    %c0_15 = arith.constant 0 : index
    %c0_16 = arith.constant 0 : index
    %36 = vector.load %arg4[%c0_15, %c0_16] : memref<384x128xbf16, #tpu.memory_space<vmem>>, vector<384x128xbf16>
    %cst_17 = arith.constant dense<0.000000e+00> : vector<16x128xf32>
    %37 = tpu.matmul %35, %36, %cst_17 {dimension_numbers = #tpu.dot_dimension_numbers<[1], [0], [0], [1], [0, 0, 1, 1], [], []>} : vector<16x384xbf16>, vector<384x128xbf16>, vector<16x128xf32> -> vector<16x128xf32>
    %c0_18 = arith.constant 0 : index
    %c0_19 = arith.constant 0 : index
    %38 = vector.load %arg5[%c0_18, %c0_19] : memref<1x128xf32, #tpu.memory_space<vmem>>, vector<1x128xf32>
    %39 = vector.broadcast %38 : vector<1x128xf32> to vector<16x128xf32>
    %40 = arith.addf %37, %39 : vector<16x128xf32>
    %cst_20 = arith.constant 0.000000e+00 : f32
    %41 = vector.broadcast %cst_20 : f32 to vector<16x128xf32>
    %42 = arith.maximumf %40, %41 : vector<16x128xf32>
    %43 = arith.addf %5, %42 : vector<16x128xf32>
    %44 = tpu.iota {dimensions = array<i32: 0>} : vector<16x128xi32>
    %c16_i32_21 = arith.constant 16 : i32
    %c0_i32_22 = arith.constant 0 : i32
    %45 = arith.cmpi eq, %c16_i32_21, %c0_i32_22 : i32
    %c1_i32_23 = arith.constant 1 : i32
    %46 = arith.select %45, %c1_i32_23, %c16_i32_21 : i32
    %47 = vector.broadcast %46 : i32 to vector<16x128xi32>
    %48 = arith.remsi %44, %47 : vector<16x128xi32>
    %c0_i32_24 = arith.constant 0 : i32
    %49 = vector.broadcast %c0_i32_24 : i32 to vector<16x128xi32>
    %50 = arith.cmpi ne, %48, %49 : vector<16x128xi32>
    %c0_i32_25 = arith.constant 0 : i32
    %51 = vector.broadcast %c0_i32_25 : i32 to vector<16x128xi32>
    %52 = arith.cmpi slt, %48, %51 : vector<16x128xi32>
    %c0_i32_26 = arith.constant 0 : i32
    %53 = arith.cmpi slt, %46, %c0_i32_26 : i32
    %54 = vector.broadcast %53 : i1 to vector<16x128xi1>
    %55 = vector.broadcast %54 : vector<16x128xi1> to vector<16x128xi1>
    %56 = arith.xori %52, %55 : vector<16x128xi1>
    %57 = arith.andi %56, %50 : vector<16x128xi1>
    %58 = vector.broadcast %46 : i32 to vector<16x128xi32>
    %59 = arith.addi %48, %58 : vector<16x128xi32>
    %60 = arith.select %57, %59, %48 : vector<16x128xi1>, vector<16x128xi32>
    %c0_i32_27 = arith.constant 0 : i32
    %61 = vector.broadcast %c0_i32_27 : i32 to vector<16x128xi32>
    %62 = arith.cmpi ne, %60, %61 : vector<16x128xi32>
    %c1_i32_28 = arith.constant 1 : i32
    %63 = tpu.dynamic_rotate %43 by %c1_i32_28 dim 0 : vector<16x128xf32>, i32 -> vector<16x128xf32>
    %cst_29 = arith.constant 0.000000e+00 : f32
    %64 = vector.broadcast %cst_29 : f32 to vector<16x128xf32>
    %65 = arith.select %62, %63, %64 : vector<16x128xi1>, vector<16x128xf32>
    %c15_i32_30 = arith.constant 15 : i32
    %66 = vector.broadcast %c15_i32_30 : i32 to vector<16x128xi32>
    %67 = arith.cmpi ne, %60, %66 : vector<16x128xi32>
    %c15_i32_31 = arith.constant 15 : i32
    %68 = tpu.dynamic_rotate %43 by %c15_i32_31 dim 0 : vector<16x128xf32>, i32 -> vector<16x128xf32>
    %cst_32 = arith.constant 0.000000e+00 : f32
    %69 = vector.broadcast %cst_32 : f32 to vector<16x128xf32>
    %70 = arith.select %67, %68, %69 : vector<16x128xi1>, vector<16x128xf32>
    %71 = tpu.concatenate %65, %43, %70 in 1 : vector<16x128xf32>, vector<16x128xf32>, vector<16x128xf32> -> vector<16x384xf32>
    %72 = arith.truncf %71 : vector<16x384xf32> to vector<16x384xbf16>
    %c0_33 = arith.constant 0 : index
    %c0_34 = arith.constant 0 : index
    %73 = vector.load %arg4[%c0_33, %c0_34] : memref<384x128xbf16, #tpu.memory_space<vmem>>, vector<384x128xbf16>
    %cst_35 = arith.constant dense<0.000000e+00> : vector<16x128xf32>
    %74 = tpu.matmul %72, %73, %cst_35 {dimension_numbers = #tpu.dot_dimension_numbers<[1], [0], [0], [1], [0, 0, 1, 1], [], []>} : vector<16x384xbf16>, vector<384x128xbf16>, vector<16x128xf32> -> vector<16x128xf32>
    %c0_36 = arith.constant 0 : index
    %c0_37 = arith.constant 0 : index
    %75 = vector.load %arg5[%c0_36, %c0_37] : memref<1x128xf32, #tpu.memory_space<vmem>>, vector<1x128xf32>
    %76 = vector.broadcast %75 : vector<1x128xf32> to vector<16x128xf32>
    %77 = arith.addf %74, %76 : vector<16x128xf32>
    %cst_38 = arith.constant 0.000000e+00 : f32
    %78 = vector.broadcast %cst_38 : f32 to vector<16x128xf32>
    %79 = arith.maximumf %77, %78 : vector<16x128xf32>
    %80 = arith.addf %5, %79 : vector<16x128xf32>
    %81 = tpu.iota {dimensions = array<i32: 0>} : vector<16x128xi32>
    %c16_i32_39 = arith.constant 16 : i32
    %c0_i32_40 = arith.constant 0 : i32
    %82 = arith.cmpi eq, %c16_i32_39, %c0_i32_40 : i32
    %c1_i32_41 = arith.constant 1 : i32
    %83 = arith.select %82, %c1_i32_41, %c16_i32_39 : i32
    %84 = vector.broadcast %83 : i32 to vector<16x128xi32>
    %85 = arith.remsi %81, %84 : vector<16x128xi32>
    %c0_i32_42 = arith.constant 0 : i32
    %86 = vector.broadcast %c0_i32_42 : i32 to vector<16x128xi32>
    %87 = arith.cmpi ne, %85, %86 : vector<16x128xi32>
    %c0_i32_43 = arith.constant 0 : i32
    %88 = vector.broadcast %c0_i32_43 : i32 to vector<16x128xi32>
    %89 = arith.cmpi slt, %85, %88 : vector<16x128xi32>
    %c0_i32_44 = arith.constant 0 : i32
    %90 = arith.cmpi slt, %83, %c0_i32_44 : i32
    %91 = vector.broadcast %90 : i1 to vector<16x128xi1>
    %92 = vector.broadcast %91 : vector<16x128xi1> to vector<16x128xi1>
    %93 = arith.xori %89, %92 : vector<16x128xi1>
    %94 = arith.andi %93, %87 : vector<16x128xi1>
    %95 = vector.broadcast %83 : i32 to vector<16x128xi32>
    %96 = arith.addi %85, %95 : vector<16x128xi32>
    %97 = arith.select %94, %96, %85 : vector<16x128xi1>, vector<16x128xi32>
    %c0_i32_45 = arith.constant 0 : i32
    %98 = vector.broadcast %c0_i32_45 : i32 to vector<16x128xi32>
    %99 = arith.cmpi ne, %97, %98 : vector<16x128xi32>
    %c1_i32_46 = arith.constant 1 : i32
    %100 = tpu.dynamic_rotate %80 by %c1_i32_46 dim 0 : vector<16x128xf32>, i32 -> vector<16x128xf32>
    %cst_47 = arith.constant 0.000000e+00 : f32
    %101 = vector.broadcast %cst_47 : f32 to vector<16x128xf32>
    %102 = arith.select %99, %100, %101 : vector<16x128xi1>, vector<16x128xf32>
    %c15_i32_48 = arith.constant 15 : i32
    %103 = vector.broadcast %c15_i32_48 : i32 to vector<16x128xi32>
    %104 = arith.cmpi ne, %97, %103 : vector<16x128xi32>
    %c15_i32_49 = arith.constant 15 : i32
    %105 = tpu.dynamic_rotate %80 by %c15_i32_49 dim 0 : vector<16x128xf32>, i32 -> vector<16x128xf32>
    %cst_50 = arith.constant 0.000000e+00 : f32
    %106 = vector.broadcast %cst_50 : f32 to vector<16x128xf32>
    %107 = arith.select %104, %105, %106 : vector<16x128xi1>, vector<16x128xf32>
    %108 = tpu.concatenate %102, %80, %107 in 1 : vector<16x128xf32>, vector<16x128xf32>, vector<16x128xf32> -> vector<16x384xf32>
    %109 = arith.truncf %108 : vector<16x384xf32> to vector<16x384xbf16>
    %c0_51 = arith.constant 0 : index
    %c0_52 = arith.constant 0 : index
    %110 = vector.load %arg4[%c0_51, %c0_52] : memref<384x128xbf16, #tpu.memory_space<vmem>>, vector<384x128xbf16>
    %cst_53 = arith.constant dense<0.000000e+00> : vector<16x128xf32>
    %111 = tpu.matmul %109, %110, %cst_53 {dimension_numbers = #tpu.dot_dimension_numbers<[1], [0], [0], [1], [0, 0, 1, 1], [], []>} : vector<16x384xbf16>, vector<384x128xbf16>, vector<16x128xf32> -> vector<16x128xf32>
    %c0_54 = arith.constant 0 : index
    %c0_55 = arith.constant 0 : index
    %112 = vector.load %arg5[%c0_54, %c0_55] : memref<1x128xf32, #tpu.memory_space<vmem>>, vector<1x128xf32>
    %113 = vector.broadcast %112 : vector<1x128xf32> to vector<16x128xf32>
    %114 = arith.addf %111, %113 : vector<16x128xf32>
    %cst_56 = arith.constant 0.000000e+00 : f32
    %115 = vector.broadcast %cst_56 : f32 to vector<16x128xf32>
    %116 = arith.maximumf %114, %115 : vector<16x128xf32>
    %117 = tpu.iota {dimensions = array<i32: 0>} : vector<16x128xi32>
    %c16_i32_57 = arith.constant 16 : i32
    %c0_i32_58 = arith.constant 0 : i32
    %118 = arith.cmpi eq, %c16_i32_57, %c0_i32_58 : i32
    %c1_i32_59 = arith.constant 1 : i32
    %119 = arith.select %118, %c1_i32_59, %c16_i32_57 : i32
    %120 = vector.broadcast %119 : i32 to vector<16x128xi32>
    %121 = arith.remsi %117, %120 : vector<16x128xi32>
    %c0_i32_60 = arith.constant 0 : i32
    %122 = vector.broadcast %c0_i32_60 : i32 to vector<16x128xi32>
    %123 = arith.cmpi ne, %121, %122 : vector<16x128xi32>
    %c0_i32_61 = arith.constant 0 : i32
    %124 = vector.broadcast %c0_i32_61 : i32 to vector<16x128xi32>
    %125 = arith.cmpi slt, %121, %124 : vector<16x128xi32>
    %c0_i32_62 = arith.constant 0 : i32
    %126 = arith.cmpi slt, %119, %c0_i32_62 : i32
    %127 = vector.broadcast %126 : i1 to vector<16x128xi1>
    %128 = vector.broadcast %127 : vector<16x128xi1> to vector<16x128xi1>
    %129 = arith.xori %125, %128 : vector<16x128xi1>
    %130 = arith.andi %129, %123 : vector<16x128xi1>
    %131 = vector.broadcast %119 : i32 to vector<16x128xi32>
    %132 = arith.addi %121, %131 : vector<16x128xi32>
    %133 = arith.select %130, %132, %121 : vector<16x128xi1>, vector<16x128xi32>
    %c0_i32_63 = arith.constant 0 : i32
    %134 = vector.broadcast %c0_i32_63 : i32 to vector<16x128xi32>
    %135 = arith.cmpi ne, %133, %134 : vector<16x128xi32>
    %c1_i32_64 = arith.constant 1 : i32
    %136 = tpu.dynamic_rotate %116 by %c1_i32_64 dim 0 : vector<16x128xf32>, i32 -> vector<16x128xf32>
    %cst_65 = arith.constant 0.000000e+00 : f32
    %137 = vector.broadcast %cst_65 : f32 to vector<16x128xf32>
    %138 = arith.select %135, %136, %137 : vector<16x128xi1>, vector<16x128xf32>
    %c15_i32_66 = arith.constant 15 : i32
    %139 = vector.broadcast %c15_i32_66 : i32 to vector<16x128xi32>
    %140 = arith.cmpi ne, %133, %139 : vector<16x128xi32>
    %c15_i32_67 = arith.constant 15 : i32
    %141 = tpu.dynamic_rotate %116 by %c15_i32_67 dim 0 : vector<16x128xf32>, i32 -> vector<16x128xf32>
    %cst_68 = arith.constant 0.000000e+00 : f32
    %142 = vector.broadcast %cst_68 : f32 to vector<16x128xf32>
    %143 = arith.select %140, %141, %142 : vector<16x128xi1>, vector<16x128xf32>
    %144 = tpu.concatenate %138, %116, %143 in 1 : vector<16x128xf32>, vector<16x128xf32>, vector<16x128xf32> -> vector<16x384xf32>
    %145 = arith.truncf %144 : vector<16x384xf32> to vector<16x384xbf16>
    %c0_69 = arith.constant 0 : index
    %c0_70 = arith.constant 0 : index
    %146 = vector.load %arg6[%c0_69, %c0_70] : memref<384x128xbf16, #tpu.memory_space<vmem>>, vector<384x128xbf16>
    %cst_71 = arith.constant dense<0.000000e+00> : vector<16x128xf32>
    %147 = tpu.matmul %145, %146, %cst_71 {dimension_numbers = #tpu.dot_dimension_numbers<[1], [0], [0], [1], [0, 0, 1, 1], [], []>} : vector<16x384xbf16>, vector<384x128xbf16>, vector<16x128xf32> -> vector<16x128xf32>
    %c0_72 = arith.constant 0 : index
    %c0_73 = arith.constant 0 : index
    %148 = vector.load %arg7[%c0_72, %c0_73] : memref<1x128xf32, #tpu.memory_space<vmem>>, vector<1x128xf32>
    %149 = vector.broadcast %148 : vector<1x128xf32> to vector<16x128xf32>
    %150 = arith.addf %147, %149 : vector<16x128xf32>
    %cst_74 = arith.constant 0.000000e+00 : f32
    %151 = vector.broadcast %cst_74 : f32 to vector<16x128xf32>
    %152 = arith.maximumf %150, %151 : vector<16x128xf32>
    %153 = arith.addf %116, %152 : vector<16x128xf32>
    %154 = tpu.iota {dimensions = array<i32: 0>} : vector<16x128xi32>
    %c16_i32_75 = arith.constant 16 : i32
    %c0_i32_76 = arith.constant 0 : i32
    %155 = arith.cmpi eq, %c16_i32_75, %c0_i32_76 : i32
    %c1_i32_77 = arith.constant 1 : i32
    %156 = arith.select %155, %c1_i32_77, %c16_i32_75 : i32
    %157 = vector.broadcast %156 : i32 to vector<16x128xi32>
    %158 = arith.remsi %154, %157 : vector<16x128xi32>
    %c0_i32_78 = arith.constant 0 : i32
    %159 = vector.broadcast %c0_i32_78 : i32 to vector<16x128xi32>
    %160 = arith.cmpi ne, %158, %159 : vector<16x128xi32>
    %c0_i32_79 = arith.constant 0 : i32
    %161 = vector.broadcast %c0_i32_79 : i32 to vector<16x128xi32>
    %162 = arith.cmpi slt, %158, %161 : vector<16x128xi32>
    %c0_i32_80 = arith.constant 0 : i32
    %163 = arith.cmpi slt, %156, %c0_i32_80 : i32
    %164 = vector.broadcast %163 : i1 to vector<16x128xi1>
    %165 = vector.broadcast %164 : vector<16x128xi1> to vector<16x128xi1>
    %166 = arith.xori %162, %165 : vector<16x128xi1>
    %167 = arith.andi %166, %160 : vector<16x128xi1>
    %168 = vector.broadcast %156 : i32 to vector<16x128xi32>
    %169 = arith.addi %158, %168 : vector<16x128xi32>
    %170 = arith.select %167, %169, %158 : vector<16x128xi1>, vector<16x128xi32>
    %c0_i32_81 = arith.constant 0 : i32
    %171 = vector.broadcast %c0_i32_81 : i32 to vector<16x128xi32>
    %172 = arith.cmpi ne, %170, %171 : vector<16x128xi32>
    %c1_i32_82 = arith.constant 1 : i32
    %173 = tpu.dynamic_rotate %153 by %c1_i32_82 dim 0 : vector<16x128xf32>, i32 -> vector<16x128xf32>
    %cst_83 = arith.constant 0.000000e+00 : f32
    %174 = vector.broadcast %cst_83 : f32 to vector<16x128xf32>
    %175 = arith.select %172, %173, %174 : vector<16x128xi1>, vector<16x128xf32>
    %c15_i32_84 = arith.constant 15 : i32
    %176 = vector.broadcast %c15_i32_84 : i32 to vector<16x128xi32>
    %177 = arith.cmpi ne, %170, %176 : vector<16x128xi32>
    %c15_i32_85 = arith.constant 15 : i32
    %178 = tpu.dynamic_rotate %153 by %c15_i32_85 dim 0 : vector<16x128xf32>, i32 -> vector<16x128xf32>
    %cst_86 = arith.constant 0.000000e+00 : f32
    %179 = vector.broadcast %cst_86 : f32 to vector<16x128xf32>
    %180 = arith.select %177, %178, %179 : vector<16x128xi1>, vector<16x128xf32>
    %181 = tpu.concatenate %175, %153, %180 in 1 : vector<16x128xf32>, vector<16x128xf32>, vector<16x128xf32> -> vector<16x384xf32>
    %182 = arith.truncf %181 : vector<16x384xf32> to vector<16x384xbf16>
    %c0_87 = arith.constant 0 : index
    %c0_88 = arith.constant 0 : index
    %183 = vector.load %arg6[%c0_87, %c0_88] : memref<384x128xbf16, #tpu.memory_space<vmem>>, vector<384x128xbf16>
    %cst_89 = arith.constant dense<0.000000e+00> : vector<16x128xf32>
    %184 = tpu.matmul %182, %183, %cst_89 {dimension_numbers = #tpu.dot_dimension_numbers<[1], [0], [0], [1], [0, 0, 1, 1], [], []>} : vector<16x384xbf16>, vector<384x128xbf16>, vector<16x128xf32> -> vector<16x128xf32>
    %c0_90 = arith.constant 0 : index
    %c0_91 = arith.constant 0 : index
    %185 = vector.load %arg7[%c0_90, %c0_91] : memref<1x128xf32, #tpu.memory_space<vmem>>, vector<1x128xf32>
    %186 = vector.broadcast %185 : vector<1x128xf32> to vector<16x128xf32>
    %187 = arith.addf %184, %186 : vector<16x128xf32>
    %cst_92 = arith.constant 0.000000e+00 : f32
    %188 = vector.broadcast %cst_92 : f32 to vector<16x128xf32>
    %189 = arith.maximumf %187, %188 : vector<16x128xf32>
    %190 = arith.addf %116, %189 : vector<16x128xf32>
    %191 = tpu.iota {dimensions = array<i32: 0>} : vector<16x128xi32>
    %c16_i32_93 = arith.constant 16 : i32
    %c0_i32_94 = arith.constant 0 : i32
    %192 = arith.cmpi eq, %c16_i32_93, %c0_i32_94 : i32
    %c1_i32_95 = arith.constant 1 : i32
    %193 = arith.select %192, %c1_i32_95, %c16_i32_93 : i32
    %194 = vector.broadcast %193 : i32 to vector<16x128xi32>
    %195 = arith.remsi %191, %194 : vector<16x128xi32>
    %c0_i32_96 = arith.constant 0 : i32
    %196 = vector.broadcast %c0_i32_96 : i32 to vector<16x128xi32>
    %197 = arith.cmpi ne, %195, %196 : vector<16x128xi32>
    %c0_i32_97 = arith.constant 0 : i32
    %198 = vector.broadcast %c0_i32_97 : i32 to vector<16x128xi32>
    %199 = arith.cmpi slt, %195, %198 : vector<16x128xi32>
    %c0_i32_98 = arith.constant 0 : i32
    %200 = arith.cmpi slt, %193, %c0_i32_98 : i32
    %201 = vector.broadcast %200 : i1 to vector<16x128xi1>
    %202 = vector.broadcast %201 : vector<16x128xi1> to vector<16x128xi1>
    %203 = arith.xori %199, %202 : vector<16x128xi1>
    %204 = arith.andi %203, %197 : vector<16x128xi1>
    %205 = vector.broadcast %193 : i32 to vector<16x128xi32>
    %206 = arith.addi %195, %205 : vector<16x128xi32>
    %207 = arith.select %204, %206, %195 : vector<16x128xi1>, vector<16x128xi32>
    %c0_i32_99 = arith.constant 0 : i32
    %208 = vector.broadcast %c0_i32_99 : i32 to vector<16x128xi32>
    %209 = arith.cmpi ne, %207, %208 : vector<16x128xi32>
    %c1_i32_100 = arith.constant 1 : i32
    %210 = tpu.dynamic_rotate %190 by %c1_i32_100 dim 0 : vector<16x128xf32>, i32 -> vector<16x128xf32>
    %cst_101 = arith.constant 0.000000e+00 : f32
    %211 = vector.broadcast %cst_101 : f32 to vector<16x128xf32>
    %212 = arith.select %209, %210, %211 : vector<16x128xi1>, vector<16x128xf32>
    %c15_i32_102 = arith.constant 15 : i32
    %213 = vector.broadcast %c15_i32_102 : i32 to vector<16x128xi32>
    %214 = arith.cmpi ne, %207, %213 : vector<16x128xi32>
    %c15_i32_103 = arith.constant 15 : i32
    %215 = tpu.dynamic_rotate %190 by %c15_i32_103 dim 0 : vector<16x128xf32>, i32 -> vector<16x128xf32>
    %cst_104 = arith.constant 0.000000e+00 : f32
    %216 = vector.broadcast %cst_104 : f32 to vector<16x128xf32>
    %217 = arith.select %214, %215, %216 : vector<16x128xi1>, vector<16x128xf32>
    %218 = tpu.concatenate %212, %190, %217 in 1 : vector<16x128xf32>, vector<16x128xf32>, vector<16x128xf32> -> vector<16x384xf32>
    %219 = arith.truncf %218 : vector<16x384xf32> to vector<16x384xbf16>
    %c0_105 = arith.constant 0 : index
    %c0_106 = arith.constant 0 : index
    %220 = vector.load %arg6[%c0_105, %c0_106] : memref<384x128xbf16, #tpu.memory_space<vmem>>, vector<384x128xbf16>
    %cst_107 = arith.constant dense<0.000000e+00> : vector<16x128xf32>
    %221 = tpu.matmul %219, %220, %cst_107 {dimension_numbers = #tpu.dot_dimension_numbers<[1], [0], [0], [1], [0, 0, 1, 1], [], []>} : vector<16x384xbf16>, vector<384x128xbf16>, vector<16x128xf32> -> vector<16x128xf32>
    %c0_108 = arith.constant 0 : index
    %c0_109 = arith.constant 0 : index
    %222 = vector.load %arg7[%c0_108, %c0_109] : memref<1x128xf32, #tpu.memory_space<vmem>>, vector<1x128xf32>
    %223 = vector.broadcast %222 : vector<1x128xf32> to vector<16x128xf32>
    %224 = arith.addf %221, %223 : vector<16x128xf32>
    %cst_110 = arith.constant 0.000000e+00 : f32
    %225 = vector.broadcast %cst_110 : f32 to vector<16x128xf32>
    %226 = arith.maximumf %224, %225 : vector<16x128xf32>
    %c0_111 = arith.constant 0 : index
    %c0_112 = arith.constant 0 : index
    %227 = vector.load %arg9[%c0_111, %c0_112] : memref<16x128xf32, #tpu.memory_space<vmem>>, vector<16x128xf32>
    %228 = arith.addf %227, %226 : vector<16x128xf32>
    %229 = arith.truncf %228 : vector<16x128xf32> to vector<16x128xbf16>
    %c0_113 = arith.constant 0 : index
    %c0_114 = arith.constant 0 : index
    %230 = vector.load %arg8[%c0_113, %c0_114] : memref<16x128xbf16, #tpu.memory_space<vmem>>, vector<16x128xbf16>
    tpu.vector_store %arg8[%c0_113, %c0_114], %229 {strides = array<i32>} : memref<16x128xbf16, #tpu.memory_space<vmem>>, vector<16x128xbf16>,
    return
  }
  func.func @transform_0(%arg0: i32) -> (i32, i32) {
    %c0_i32 = arith.constant 0 : i32
    %c0_i32_0 = arith.constant 0 : i32
    return %arg0, %c0_i32 : i32, i32
  }
  func.func @transform_1(%arg0: i32) -> (i32, i32) {
    %c0_i32 = arith.constant 0 : i32
    %c0_i32_0 = arith.constant 0 : i32
    %c0_i32_1 = arith.constant 0 : i32
    return %c0_i32, %c0_i32_0 : i32, i32
  }
  func.func @transform_2(%arg0: i32) -> (i32, i32) {
    %c0_i32 = arith.constant 0 : i32
    %c0_i32_0 = arith.constant 0 : i32
    %c0_i32_1 = arith.constant 0 : i32
    return %c0_i32, %c0_i32_0 : i32, i32
  }
  func.func @transform_3(%arg0: i32) -> (i32, i32) {
    %c0_i32 = arith.constant 0 : i32
    %c0_i32_0 = arith.constant 0 : i32
    %c0_i32_1 = arith.constant 0 : i32
    return %c0_i32, %c0_i32_0 : i32, i32
  }
  func.func @transform_4(%arg0: i32) -> (i32, i32) {
    %c0_i32 = arith.constant 0 : i32
    %c0_i32_0 = arith.constant 0 : i32
    %c0_i32_1 = arith.constant 0 : i32
    return %c0_i32, %c0_i32_0 : i32, i32
  }
  func.func @transform_5(%arg0: i32) -> (i32, i32) {
    %c0_i32 = arith.constant 0 : i32
    %c0_i32_0 = arith.constant 0 : i32
    %c0_i32_1 = arith.constant 0 : i32
    return %c0_i32, %c0_i32_0 : i32, i32
  }
  func.func @transform_6(%arg0: i32) -> (i32, i32) {
    %c0_i32 = arith.constant 0 : i32
    %c0_i32_0 = arith.constant 0 : i32
    %c0_i32_1 = arith.constant 0 : i32
    return %c0_i32, %c0_i32_0 : i32, i32
  }
  func.func @transform_7(%arg0: i32) -> (i32, i32) {
    %c0_i32 = arith.constant 0 : i32
    %c0_i32_0 = arith.constant 0 : i32
    return %arg0, %c0_i32 : i32, i32
  }
}

</mosaic_0001>

<llo_original>
// kernel: tpu_custom_call.1
$region0: #{tpu_custom_call.1}
  #allocation0 [shape = 'u32[]', space=smem, size = 0x4, offset = 0x4, fixed_abs, tag = 'smem constant byte address 0x4 - core index']
  #allocation1 [shape = 'u32[144,128]{1,0:T(1,128)}', space=vmem, size = 0x12000, scoped, tag = 'internal scratch']
  #allocation2 [shape = 'f32[16,128]{1,0:T(8,128)}', space=vmem, size = 0x2000, scoped, tag = 'scratch operand']
  %s0 = inlined_call_operand.hbm [shape: bf16[32,64], index: 0, kind: input, shape index: {}]
  %s1 = inlined_call_operand.hbm [shape: bf16[64,128], index: 1, kind: input, shape index: {}]
  %s2 = inlined_call_operand.vmem [shape: f32[1,128], index: 2, kind: input, shape index: {}]
  %s3 = inlined_call_operand.hbm [shape: bf16[384,128], index: 3, kind: input, shape index: {}]
  %s4 = inlined_call_operand.vmem [shape: f32[1,128], index: 4, kind: input, shape index: {}]
  %s5 = inlined_call_operand.hbm [shape: bf16[384,128], index: 5, kind: input, shape index: {}]
  %s6 = inlined_call_operand.vmem [shape: f32[1,128], index: 6, kind: input, shape index: {}]
  %s7 = inlined_call_operand.hbm [shape: bf16[32,128], index: 7, kind: output, shape index: {}]
  %s8 = sld [smem:[#allocation0]]
  $region77: #{tpu_custom_call.1} parent=0
    _
  %s10 = ssub.s32 1, %s8
  %s11 = scalar_select 0, %s10, %s8
  $region1: #{tpu_custom_call.1} parent=0
    #allocation3 [shape = 'u8[8192]{0}', space=vmem, size = 0x2000, scoped, tag = 'input window, operand 0']
    #allocation4 [shape = 's32[2]{0}', space=sflag, size = 0x8, scoped, tag = 'scoped memory for tpu_custom_call.1']
    #allocation5 [shape = 's32[2]{0}', space=sflag, size = 0x8, scoped, tag = 'scoped memory for tpu_custom_call.1']
    #allocation6 [shape = 'u8[16384]{0}', space=vmem, size = 0x4000, scoped, tag = 'input window, operand 1, single buffered']
    #allocation7 [shape = 's32[1]{0}', space=sflag, size = 0x4, scoped, tag = 'scoped memory for tpu_custom_call.1']
    #allocation8 [shape = 'u8[98304]{0}', space=vmem, size = 0x18000, scoped, tag = 'input window, operand 3, single buffered']
    #allocation9 [shape = 'u8[98304]{0}', space=vmem, size = 0x18000, scoped, tag = 'input window, operand 5, single buffered']
    #allocation10 [shape = 's32[1]{0}', space=sflag, size = 0x4, scoped, tag = 'scoped memory for tpu_custom_call.1']
    #allocation11 [shape = 'u8[8192]{0}', space=vmem, size = 0x2000, scoped, tag = 'output window, operand 0']
    %12 = vsyncpa [#allocation4], 0
    %s13 = scalar_lea.sflag [#allocation4], 1
    %14 = vsyncpa %s13, 0
    %15 = vsyncpa [#allocation7], 0
    %16 = vsyncpa [#allocation10], 0
    %17 = vsyncpa [#allocation5], 0
    %s18 = scalar_lea.sflag [#allocation5], 1
    %19 = vsyncpa %s18, 0
    loop: start=0, step=1, limit=4
    $region2: #{tpu_custom_call.1} parent=1 // loop_pre_header
      _
    $region3: #{tpu_custom_call.1} parent=1 // loop_header
      %s21 = sphi 0, %s25
      %p22 = scmp.ge.s32.totalorder %s21, 4
      %s31 = sphi 0, %s33
      %s34 = sphi 0, %s31
      %s35 = sphi 0, %s34
      %s51 = sphi 0, %s35
      %s55 = sphi 0, %s55
      %s57 = sphi 0, %s55
      %s58 = sphi 0, %s57
      %s72 = sphi 0, %s58
      %s76 = sphi 0, %s76
      %s78 = sphi 0, %s76
      %s79 = sphi 0, %s78
      %s93 = sphi 0, %s79
      %s97 = sphi 0, %s97
      %s99 = sphi 0, %s97
      %s100 = sphi 0, %s99
      %s114 = sphi 0, %s100
      %s118 = sphi 0, %s118
      %s120 = sphi 0, %s118
      %s121 = sphi 0, %s120
      %s135 = sphi 0, %s121
      %s139 = sphi 0, %s139
      %s141 = sphi 0, %s139
      %s142 = sphi 0, %s141
      %s156 = sphi 0, %s142
      %s160 = sphi 0, %s160
      %s162 = sphi 0, %s160
      %s163 = sphi 0, %s162
      %s177 = sphi 0, %s163
      %s183 = sphi 0, %s185
      %s186 = sphi 0, %s183
      %s187 = sphi 0, %s186
      %s203 = sphi 0, %s187
    $region4: #{tpu_custom_call.1} parent=1 // loop_header_branch
      %24 = sbr.rel (%p22) target = $region8
    $region5: #{tpu_custom_call.1} parent=1 // loop_body
      %s26 = ssub.s32 %s21, 1
      %s27 = ssub.s32 %s21, 2
      %s28 = sadd.s32 %s21, 1
      %s29 = ssub.s32 %s21, %s28
      %p30 = scmp.eq.s32.totalorder %s29, 0
      %s32 = sadd.s32 %s31, 1
      %s33 = scalar_select %p30, %s31, %s32
      %p36 = pneg %p30
      %p37 = scmp.eq.s32.totalorder %s21, 1
      %p38 = por %p36, %p37
      %p39 = scmp.ne.s32.totalorder %s31, %s34
      %p40 = scmp.eq.s32.totalorder %s21, 0
      %p41 = por %p39, %p40
      %p42 = scmp.ne.s32.totalorder %s31, %s34
      %p43 = scmp.eq.s32.totalorder %s26, 1
      %p44 = por %p42, %p43
      %p45 = scmp.ne.s32.totalorder %s34, %s35
      %p46 = scmp.eq.s32.totalorder %s26, 0
      %p47 = por %p45, %p46
      %p48 = scmp.ne.s32.totalorder %s34, %s35
      %p49 = scmp.eq.s32.totalorder %s27, 1
      %p50 = por %p48, %p49
      %p52 = scmp.ne.s32.totalorder %s35, %s51
      %p53 = scmp.eq.s32.totalorder %s27, 0
      %p54 = por %p52, %p53
      %s56 = sadd.s32 %s55, 1
      %p59 = scmp.eq.s32.totalorder %s21, 1
      %p60 = scmp.ne.s32.totalorder %s55, %s57
      %p61 = scmp.eq.s32.totalorder %s21, 0
      %p62 = por %p60, %p61
      %p63 = scmp.ne.s32.totalorder %s55, %s57
      %p64 = scmp.eq.s32.totalorder %s26, 1
      %p65 = por %p63, %p64
      %p66 = scmp.ne.s32.totalorder %s57, %s58
      %p67 = scmp.eq.s32.totalorder %s26, 0
      %p68 = por %p66, %p67
      %p69 = scmp.ne.s32.totalorder %s57, %s58
      %p70 = scmp.eq.s32.totalorder %s27, 1
      %p71 = por %p69, %p70
      %p73 = scmp.ne.s32.totalorder %s58, %s72
      %p74 = scmp.eq.s32.totalorder %s27, 0
      %p75 = por %p73, %p74
      %s77 = sadd.s32 %s76, 1
      %p80 = scmp.eq.s32.totalorder %s21, 1
      %p81 = scmp.ne.s32.totalorder %s76, %s78
      %p82 = scmp.eq.s32.totalorder %s21, 0
      %p83 = por %p81, %p82
      %p84 = scmp.ne.s32.totalorder %s76, %s78
      %p85 = scmp.eq.s32.totalorder %s26, 1
      %p86 = por %p84, %p85
      %p87 = scmp.ne.s32.totalorder %s78, %s79
      %p88 = scmp.eq.s32.totalorder %s26, 0
      %p89 = por %p87, %p88
      %p90 = scmp.ne.s32.totalorder %s78, %s79
      %p91 = scmp.eq.s32.totalorder %s27, 1
      %p92 = por %p90, %p91
      %p94 = scmp.ne.s32.totalorder %s79, %s93
      %p95 = scmp.eq.s32.totalorder %s27, 0
      %p96 = por %p94, %p95
      %s98 = sadd.s32 %s97, 1
      %p101 = scmp.eq.s32.totalorder %s21, 1
      %p102 = scmp.ne.s32.totalorder %s97, %s99
      %p103 = scmp.eq.s32.totalorder %s21, 0
      %p104 = por %p102, %p103
      %p105 = scmp.ne.s32.totalorder %s97, %s99
      %p106 = scmp.eq.s32.totalorder %s26, 1
      %p107 = por %p105, %p106
      %p108 = scmp.ne.s32.totalorder %s99, %s100
      %p109 = scmp.eq.s32.totalorder %s26, 0
      %p110 = por %p108, %p109
      %p111 = scmp.ne.s32.totalorder %s99, %s100
      %p112 = scmp.eq.s32.totalorder %s27, 1
      %p113 = por %p111, %p112
      %p115 = scmp.ne.s32.totalorder %s100, %s114
      %p116 = scmp.eq.s32.totalorder %s27, 0
      %p117 = por %p115, %p116
      %s119 = sadd.s32 %s118, 1
      %p122 = scmp.eq.s32.totalorder %s21, 1
      %p123 = scmp.ne.s32.totalorder %s118, %s120
      %p124 = scmp.eq.s32.totalorder %s21, 0
      %p125 = por %p123, %p124
      %p126 = scmp.ne.s32.totalorder %s118, %s120
      %p127 = scmp.eq.s32.totalorder %s26, 1
      %p128 = por %p126, %p127
      %p129 = scmp.ne.s32.totalorder %s120, %s121
      %p130 = scmp.eq.s32.totalorder %s26, 0
      %p131 = por %p129, %p130
      %p132 = scmp.ne.s32.totalorder %s120, %s121
      %p133 = scmp.eq.s32.totalorder %s27, 1
      %p134 = por %p132, %p133
      %p136 = scmp.ne.s32.totalorder %s121, %s135
      %p137 = scmp.eq.s32.totalorder %s27, 0
      %p138 = por %p136, %p137
      %s140 = sadd.s32 %s139, 1
      %p143 = scmp.eq.s32.totalorder %s21, 1
      %p144 = scmp.ne.s32.totalorder %s139, %s141
      %p145 = scmp.eq.s32.totalorder %s21, 0
      %p146 = por %p144, %p145
      %p147 = scmp.ne.s32.totalorder %s139, %s141
      %p148 = scmp.eq.s32.totalorder %s26, 1
      %p149 = por %p147, %p148
      %p150 = scmp.ne.s32.totalorder %s141, %s142
      %p151 = scmp.eq.s32.totalorder %s26, 0
      %p152 = por %p150, %p151
      %p153 = scmp.ne.s32.totalorder %s141, %s142
      %p154 = scmp.eq.s32.totalorder %s27, 1
      %p155 = por %p153, %p154
      %p157 = scmp.ne.s32.totalorder %s142, %s156
      %p158 = scmp.eq.s32.totalorder %s27, 0
      %p159 = por %p157, %p158
      %s161 = sadd.s32 %s160, 1
      %p164 = scmp.eq.s32.totalorder %s21, 1
      %p165 = scmp.ne.s32.totalorder %s160, %s162
      %p166 = scmp.eq.s32.totalorder %s21, 0
      %p167 = por %p165, %p166
      %p168 = scmp.ne.s32.totalorder %s160, %s162
      %p169 = scmp.eq.s32.totalorder %s26, 1
      %p170 = por %p168, %p169
      %p171 = scmp.ne.s32.totalorder %s162, %s163
      %p172 = scmp.eq.s32.totalorder %s26, 0
      %p173 = por %p171, %p172
      %p174 = scmp.ne.s32.totalorder %s162, %s163
      %p175 = scmp.eq.s32.totalorder %s27, 1
      %p176 = por %p174, %p175
      %p178 = scmp.ne.s32.totalorder %s163, %s177
      %p179 = scmp.eq.s32.totalorder %s27, 0
      %p180 = por %p178, %p179
      %s181 = ssub.s32 %s21, %s28
      %p182 = scmp.eq.s32.totalorder %s181, 0
      %s184 = sadd.s32 %s183, 1
      %s185 = scalar_select %p182, %s183, %s184
      %p188 = pneg %p182
      %p189 = scmp.eq.s32.totalorder %s21, 1
      %p190 = por %p188, %p189
      %p191 = scmp.ne.s32.totalorder %s183, %s186
      %p192 = scmp.eq.s32.totalorder %s21, 0
      %p193 = por %p191, %p192
      %p194 = scmp.ne.s32.totalorder %s183, %s186
      %p195 = scmp.eq.s32.totalorder %s26, 1
      %p196 = por %p194, %p195
      %p197 = scmp.ne.s32.totalorder %s186, %s187
      %p198 = scmp.eq.s32.totalorder %s26, 0
      %p199 = por %p197, %p198
      %p200 = scmp.ne.s32.totalorder %s186, %s187
      %p201 = scmp.eq.s32.totalorder %s27, 1
      %p202 = por %p200, %p201
      %p204 = scmp.ne.s32.totalorder %s187, %s203
      %p205 = scmp.eq.s32.totalorder %s27, 0
      %p206 = por %p204, %p205
      %p207 = scmp.le.s32.totalorder 1, %s21
      %p208 = scmp.lt.s32.totalorder %s21, 3
      %p209 = pnand %p207, %p208
      %p210 = pneg %p209
      // Predicated region
      $region9: #{tpu_custom_call.1} parent=5 // pred_check
        _
      $region10: #{tpu_custom_call.1} parent=5 // pred_check_branch
        %212 = sbr.rel (%p209) target = $region12
      $region11: #{tpu_custom_call.1} parent=5 // pred_region
        %s213 = ssub.s32 %s21, 1
        // Predicated region
        $region13: #{tpu_custom_call.1} parent=11 // pred_check
          %p214 = pneg %p68
        $region14: #{tpu_custom_call.1} parent=11 // pred_check_branch
          %216 = sbr.rel (%p214) target = $region16
        $region15: #{tpu_custom_call.1} parent=11 // pred_region
          %s218 = ssub.s32 512, 512
          %219 = vsyncadd [#allocation7], %s218
          %s220 = sshll.u32 [#allocation6], 4
          %s221 = int_to_ptr.vmem [resolvable:$true] %s220
          %226 = dma.hbm_to_vmem [thread:$0]  %s1, 512, %s221, [#allocation7], 64, 64, 4
        $region16: #{tpu_custom_call.1} parent=11 // pred_fallthru
          _
        // Predicated region
        $region17: #{tpu_custom_call.1} parent=11 // pred_check
          %p227 = pneg %p89
        $region18: #{tpu_custom_call.1} parent=11 // pred_check_branch
          %229 = sbr.rel (%p227) target = $region20
        $region19: #{tpu_custom_call.1} parent=11 // pred_region
          _
        $region20: #{tpu_custom_call.1} parent=11 // pred_fallthru
          _
        // Predicated region
        $region21: #{tpu_custom_call.1} parent=11 // pred_check
          %p230 = pneg %p110
        $region22: #{tpu_custom_call.1} parent=11 // pred_check_branch
          %232 = sbr.rel (%p230) target = $region24
        $region23: #{tpu_custom_call.1} parent=11 // pred_region
          %s234 = ssub.s32 3072, 3072
          %235 = vsyncadd [#allocation7], %s234
          %s236 = sshll.u32 [#allocation8], 4
          %s237 = int_to_ptr.vmem [resolvable:$true] %s236
          %242 = dma.hbm_to_vmem [thread:$0]  %s3, 3072, %s237, [#allocation7], 64, 64, 4
        $region24: #{tpu_custom_call.1} parent=11 // pred_fallthru
          _
        // Predicated region
        $region25: #{tpu_custom_call.1} parent=11 // pred_check
          %p243 = pneg %p131
        $region26: #{tpu_custom_call.1} parent=11 // pred_check_branch
          %245 = sbr.rel (%p243) target = $region28
        $region27: #{tpu_custom_call.1} parent=11 // pred_region
          _
        $region28: #{tpu_custom_call.1} parent=11 // pred_fallthru
          _
        // Predicated region
        $region29: #{tpu_custom_call.1} parent=11 // pred_check
          %p246 = pneg %p152
        $region30: #{tpu_custom_call.1} parent=11 // pred_check_branch
          %248 = sbr.rel (%p246) target = $region32
        $region31: #{tpu_custom_call.1} parent=11 // pred_region
          %s250 = ssub.s32 3072, 3072
          %251 = vsyncadd [#allocation10], %s250
          %s252 = sshll.u32 [#allocation9], 4
          %s253 = int_to_ptr.vmem [resolvable:$true] %s252
          %258 = dma.hbm_to_vmem [thread:$0]  %s5, 3072, %s253, [#allocation10], 64, 64, 4
        $region32: #{tpu_custom_call.1} parent=11 // pred_fallthru
          _
        // Predicated region
        $region33: #{tpu_custom_call.1} parent=11 // pred_check
          %p259 = pneg %p173
        $region34: #{tpu_custom_call.1} parent=11 // pred_check_branch
          %261 = sbr.rel (%p259) target = $region36
        $region35: #{tpu_custom_call.1} parent=11 // pred_region
          _
        $region36: #{tpu_custom_call.1} parent=11 // pred_fallthru
          _
      $region12: #{tpu_custom_call.1} parent=5 // pred_fallthru
        _
      %p262 = scmp.lt.s32.totalorder %s21, 2
      // Predicated region
      $region37: #{tpu_custom_call.1} parent=5 // pred_check
        %p263 = pneg %p262
      $region38: #{tpu_custom_call.1} parent=5 // pred_check_branch
        %265 = sbr.rel (%p263) target = $region40
      $region39: #{tpu_custom_call.1} parent=5 // pred_region
        // Predicated region
        $region41: #{tpu_custom_call.1} parent=39 // pred_check
          %p266 = pneg %p41
        $region42: #{tpu_custom_call.1} parent=39 // pred_check_branch
          %268 = sbr.rel (%p266) target = $region44
        $region43: #{tpu_custom_call.1} parent=39 // pred_region
          %s269 = sand.u32 %s31, 1
          %s270 = scalar_lea.sflag [#allocation4], %s269
          %s271 = sand.u32 %s31, 1
          %s272 = smul.addr %s271, 8
          %s273 = scalar_lea.vmem [#allocation3], %s272
          %s274 = smul.u32 2, %s21
          %s276 = ssub.s32 128, 128
          %277 = vsyncadd %s270, %s276
          %s278 = smul.addr %s274, 64
          %s279 = scalar_lea.hbm %s0, %s278
          %s280 = sshll.u32 %s273, 4
          %s281 = int_to_ptr.vmem [resolvable:$true] %s280
          %286 = dma.hbm_to_vmem [thread:$0]  %s279, 128, %s281, %s270, 64, 64, 4
        $region44: #{tpu_custom_call.1} parent=39 // pred_fallthru
          _
      $region40: #{tpu_custom_call.1} parent=5 // pred_fallthru
        _
      %p287 = scmp.le.s32.totalorder 1, %s21
      %p288 = scmp.lt.s32.totalorder %s21, 3
      %p289 = pnand %p287, %p288
      %p290 = pneg %p289
      // Predicated region
      $region45: #{tpu_custom_call.1} parent=5 // pred_check
        _
      $region46: #{tpu_custom_call.1} parent=5 // pred_check_branch
        %292 = sbr.rel (%p289) target = $region48
      $region47: #{tpu_custom_call.1} parent=5 // pred_region
        %s293 = ssub.s32 %s21, 1
        %s294 = sand.u32 %s34, 1
        %s295 = scalar_lea.sflag [#allocation4], %s294
        %s296 = sand.u32 %s34, 1
        %s297 = smul.addr %s296, 8
        %s298 = scalar_lea.vmem [#allocation3], %s297
        // Predicated region
        $region49: #{tpu_custom_call.1} parent=47 // pred_check
          %p299 = pneg %p47
        $region50: #{tpu_custom_call.1} parent=47 // pred_check_branch
          %301 = sbr.rel (%p299) target = $region52
        $region51: #{tpu_custom_call.1} parent=47 // pred_region
          %302 = dma.done %s295, 128
        $region52: #{tpu_custom_call.1} parent=47 // pred_fallthru
          _
        // Predicated region
        $region53: #{tpu_custom_call.1} parent=47 // pred_check
          %p303 = pneg %p68
        $region54: #{tpu_custom_call.1} parent=47 // pred_check_branch
          %305 = sbr.rel (%p303) target = $region56
        $region55: #{tpu_custom_call.1} parent=47 // pred_region
          %306 = dma.done [#allocation7], 512
        $region56: #{tpu_custom_call.1} parent=47 // pred_fallthru
          _
        // Predicated region
        $region57: #{tpu_custom_call.1} parent=47 // pred_check
          %p307 = pneg %p110
        $region58: #{tpu_custom_call.1} parent=47 // pred_check_branch
          %309 = sbr.rel (%p307) target = $region60
        $region59: #{tpu_custom_call.1} parent=47 // pred_region
          %310 = dma.done [#allocation7], 3072
        $region60: #{tpu_custom_call.1} parent=47 // pred_fallthru
          _
        // Predicated region
        $region61: #{tpu_custom_call.1} parent=47 // pred_check
          %p311 = pneg %p152
        $region62: #{tpu_custom_call.1} parent=47 // pred_check_branch
          %313 = sbr.rel (%p311) target = $region64
        $region63: #{tpu_custom_call.1} parent=47 // pred_region
          %314 = dma.done [#allocation10], 3072
        $region64: #{tpu_custom_call.1} parent=47 // pred_fallthru
          _
        %s315 = sand.u32 %s34, 1
        %s316 = scalar_lea.sflag [#allocation4], %s315
        %s317 = sand.u32 %s34, 1
        %s318 = smul.addr %s317, 8
        %s319 = scalar_lea.vmem [#allocation3], %s318
        %p320 = pneg %p47
        %p321 = pneg %p44
        %p322 = pneg %p68
        %p323 = pneg %p65
        %p324 = pneg %p89
        %p325 = pneg %p86
        %p326 = pneg %p110
        %p327 = pneg %p107
        %p328 = pneg %p131
        %p329 = pneg %p128
        %p330 = pneg %p152
        %p331 = pneg %p149
        %p332 = pneg %p173
        %p333 = pneg %p170
        %p334 = pneg %p199
        %p335 = pneg %p196
        %s336 = sand.u32 %s186, 1
        %s337 = scalar_lea.sflag [#allocation5], %s336
        %s338 = sand.u32 %s186, 1
        %s339 = smul.addr %s338, 8
        %s340 = scalar_lea.vmem [#allocation11], %s339
        %s341 = smul.u32 2, %s26
        %s342 = smul.u32 2, %s26
        %v344 = vld [vmem:[%s298] sm:$0xf]
        %v345 = vld [vmem:[%s298 + $0x4] sm:$0xf]
        %v346 = vld [vmem:[#allocation6] sm:$0xf]
        %v347 = vld [vmem:[#allocation6 + $0x4] sm:$0xf]
        %v348 = vld [vmem:[#allocation6 + $0x8] sm:$0xf]
        %v349 = vld [vmem:[#allocation6 + $0xc] sm:$0xf]
        %v350 = vld [vmem:[#allocation6 + $0x10] sm:$0xf]
        %v351 = vld [vmem:[#allocation6 + $0x14] sm:$0xf]
        %v352 = vld [vmem:[#allocation6 + $0x18] sm:$0xf]
        %v353 = vld [vmem:[#allocation6 + $0x1c] sm:$0xf]
        %v354 = vld [vmem:[%s2] sm:$0x1]
        %v356 = vlaneseq
        %v357 = vshrl.u32 %v356, 7
        %v358 = vsub.s32 0, %v357
        %v359 = vrot.slane %v354, %v358
        %v363 = vunpack.c.l.b16 %v344
        %v364 = vunpack.c.l.b16 %v345
        %v365 = vpack.c.b16 %v364, %v363
        %v374 = vunpack.c.l.b16 %v346
        %v375 = vunpack.c.l.b16 %v347
        %v376 = vunpack.c.l.b16 %v348
        %v377 = vunpack.c.l.b16 %v349
        %v378 = vunpack.c.l.b16 %v350
        %v379 = vunpack.c.l.b16 %v351
        %v380 = vunpack.c.l.b16 %v352
        %v381 = vunpack.c.l.b16 %v353
        %v382 = vpack.c.b16 %v375, %v374
        %v383 = vpack.c.b16 %v377, %v376
        %v384 = vpack.c.b16 %v379, %v378
        %v385 = vpack.c.b16 %v381, %v380
        %vm390 = vcmask 523264
        %v392 = vsel %vm390, %v365, 0
        %394 = vmatprep.subr.bf16.mxu0 0
        %395 = vmatpush1.bf16.msra.mxu0 %v382
        %396 = vmatprep.subr.bf16.mxu0 0
        %397 = vmatpush1.bf16.msra.mxu0 %v383
        %398 = vmatprep.subr.bf16.mxu0 0
        %399 = vmatpush1.bf16.msra.mxu0 %v384
        %400 = vmatprep.subr.bf16.mxu0 0
        %401 = vmatpush1.bf16.msra.mxu0 %v385
        %402 = vmatprep.subr.bf16.mxu0 0
        %403 = vmatpush1.bf16.msra.mxu0 0
        %404 = vmatprep.subr.bf16.mxu0 0
        %405 = vmatpush1.bf16.msra.mxu0 0
        %406 = vmatprep.subr.bf16.mxu0 0
        %407 = vmatpush1.bf16.msra.mxu0 0
        %408 = vmatprep.subr.bf16.mxu0 0
        %409 = vmatpush1.bf16.msra.mxu0 0
        %410 = vmatprep.subr.bf16.mxu0 0
        %411 = vmatpush1.bf16.msra.mxu0 0
        %412 = vmatprep.subr.bf16.mxu0 0
        %413 = vmatpush1.bf16.msra.mxu0 0
        %414 = vmatprep.subr.bf16.mxu0 0
        %415 = vmatpush1.bf16.msra.mxu0 0
        %416 = vmatprep.subr.bf16.mxu0 0
        %417 = vmatpush1.bf16.msra.mxu0 0
        %418 = vmatprep.subr.bf16.mxu0 0
        %419 = vmatpush1.bf16.msra.mxu0 0
        %420 = vmatprep.subr.bf16.mxu0 0
        %421 = vmatpush1.bf16.msra.mxu0 0
        %422 = vmatprep.subr.bf16.mxu0 0
        %423 = vmatpush1.bf16.msra.mxu0 0
        %424 = vmatprep.subr.bf16.mxu0 0
        %425 = vmatpush1.bf16.msra.mxu0 0
        %426 = vmatprep.mubr.bf16.mxu0 0
        %427 = vmatmul.mubr.bf16.gmra.mrb[0].mxu0 %v392
        %v428 = vpop.f32.mrb[0].mxu0
        %v429 = vadd.f32 %v359, %v428
        %v430 = vpop.f32.mrb[0].mxu0
        %v431 = vpop.f32.mrb[0].mxu0
        %v432 = vadd.f32 %v359, %v431
        %v433 = vpop.f32.mrb[0].mxu0
        %434 = vdwg.mxu0
        %435 = vst [vmem:[#allocation2] sm:$0xff] %v429
        %436 = vst [vmem:[#allocation2 + $0x8] sm:$0xff] %v432
        %v437 = vlaneseq
        %v438 = vshrl.u32 %v437, 7
        %v439 = vadd.s32 %v438, 8
        %vm440 = vcmp.lt.s32.totalorder %v438, 0
        %v441 = vsub.s32 0, %v438
        %v442 = vsel %vm440, %v441, %v438
        %v443 = vshrl.u32 %v442, 4
        %v444 = vand.u32 %v442, 15
        %v445 = vsub.s32 0, %v444
        %v446 = vsel %vm440, %v445, %v444
        %vm447 = vcmp.lt.s32.totalorder %v439, 0
        %v448 = vsub.s32 0, %v439
        %v449 = vsel %vm447, %v448, %v439
        %v450 = vshrl.u32 %v449, 4
        %v451 = vand.u32 %v449, 15
        %v452 = vsub.s32 0, %v451
        %v453 = vsel %vm447, %v452, %v451
        %vm454 = vcmp.ne.s32.totalorder %v446, 0
        %vm455 = vcmp.ne.s32.totalorder %v453, 0
        %vm456 = vcmp.lt.s32.totalorder %v446, 0
        %vm457 = vcmp.lt.s32.totalorder %v453, 0
        %vm458 = vmand %vm456, %vm454
        %vm459 = vmand %vm457, %vm455
        %v460 = vadd.s32 %v446, 16
        %v461 = vadd.s32 %v453, 16
        %v462 = vsel %vm458, %v460, %v446
        %v463 = vsel %vm459, %v461, %v453
        %vm464 = vcmp.ne.s32.totalorder %v462, 0
        %vm465 = vcmp.ne.s32.totalorder %v463, 0
        %v466 = vrot.slane %v429, 7
        %v467 = vrot.slane %v432, 7
        %vm468 = vcmp.lt.s32.totalorder %v438, 1
        %v469 = vsel %vm468, %v466, %v467
        %v470 = vsel %vm468, %v467, %v466
        %v471 = vsel %vm464, %v470, 0.0
        %v472 = vsel %vm465, %v469, 0.0
        %vm473 = vcmp.ne.s32.totalorder %v462, 15
        %vm474 = vcmp.ne.s32.totalorder %v463, 15
        %v475 = vrot.slane %v429, 1
        %v476 = vrot.slane %v432, 1
        %vm477 = vcmp.lt.s32.totalorder %v438, 7
        %v478 = vsel %vm477, %v475, %v476
        %v479 = vsel %vm477, %v476, %v475
        %v480 = vsel %vm473, %v478, 0.0
        %v481 = vsel %vm474, %v479, 0.0
        %v482 = vpack.c.bf16 %v472, %v471
        %v483 = vpack.c.bf16 %v432, %v429
        %v484 = vpack.c.bf16 %v481, %v480
        %v485 = vld [vmem:[#allocation8] sm:$0xf]
        %v486 = vld [vmem:[#allocation8 + $0x4] sm:$0xf]
        %v487 = vld [vmem:[#allocation8 + $0x8] sm:$0xf]
        %v488 = vld [vmem:[#allocation8 + $0xc] sm:$0xf]
        %v489 = vld [vmem:[#allocation8 + $0x10] sm:$0xf]
        %v490 = vld [vmem:[#allocation8 + $0x14] sm:$0xf]
        %v491 = vld [vmem:[#allocation8 + $0x18] sm:$0xf]
        %v492 = vld [vmem:[#allocation8 + $0x1c] sm:$0xf]
        %v493 = vld [vmem:[#allocation8 + $0x20] sm:$0xf]
        %v494 = vld [vmem:[#allocation8 + $0x24] sm:$0xf]
        %v495 = vld [vmem:[#allocation8 + $0x28] sm:$0xf]
        %v496 = vld [vmem:[#allocation8 + $0x2c] sm:$0xf]
        %v497 = vld [vmem:[#allocation8 + $0x30] sm:$0xf]
        %v498 = vld [vmem:[#allocation8 + $0x34] sm:$0xf]
        %v499 = vld [vmem:[#allocation8 + $0x38] sm:$0xf]
        %v500 = vld [vmem:[#allocation8 + $0x3c] sm:$0xf]
        %v501 = vld [vmem:[#allocation8 + $0x40] sm:$0xf]
        %v502 = vld [vmem:[#allocation8 + $0x44] sm:$0xf]
        %v503 = vld [vmem:[#allocation8 + $0x48] sm:$0xf]
        %v504 = vld [vmem:[#allocation8 + $0x4c] sm:$0xf]
        %v505 = vld [vmem:[#allocation8 + $0x50] sm:$0xf]
        %v506 = vld [vmem:[#allocation8 + $0x54] sm:$0xf]
        %v507 = vld [vmem:[#allocation8 + $0x58] sm:$0xf]
        %v508 = vld [vmem:[#allocation8 + $0x5c] sm:$0xf]
        %v509 = vld [vmem:[#allocation8 + $0x60] sm:$0xf]
        %v510 = vld [vmem:[#allocation8 + $0x64] sm:$0xf]
        %v511 = vld [vmem:[#allocation8 + $0x68] sm:$0xf]
        %v512 = vld [vmem:[#allocation8 + $0x6c] sm:$0xf]
        %v513 = vld [vmem:[#allocation8 + $0x70] sm:$0xf]
        %v514 = vld [vmem:[#allocation8 + $0x74] sm:$0xf]
        %v515 = vld [vmem:[#allocation8 + $0x78] sm:$0xf]
        %v516 = vld [vmem:[#allocation8 + $0x7c] sm:$0xf]
        %v517 = vld [vmem:[#allocation8 + $0x80] sm:$0xf]
        %v518 = vld [vmem:[#allocation8 + $0x84] sm:$0xf]
        %v519 = vld [vmem:[#allocation8 + $0x88] sm:$0xf]
        %v520 = vld [vmem:[#allocation8 + $0x8c] sm:$0xf]
        %v521 = vld [vmem:[#allocation8 + $0x90] sm:$0xf]
        %v522 = vld [vmem:[#allocation8 + $0x94] sm:$0xf]
        %v523 = vld [vmem:[#allocation8 + $0x98] sm:$0xf]
        %v524 = vld [vmem:[#allocation8 + $0x9c] sm:$0xf]
        %v525 = vld [vmem:[#allocation8 + $0xa0] sm:$0xf]
        %v526 = vld [vmem:[#allocation8 + $0xa4] sm:$0xf]
        %v527 = vld [vmem:[#allocation8 + $0xa8] sm:$0xf]
        %v528 = vld [vmem:[#allocation8 + $0xac] sm:$0xf]
        %v529 = vld [vmem:[#allocation8 + $0xb0] sm:$0xf]
        %v530 = vld [vmem:[#allocation8 + $0xb4] sm:$0xf]
        %v531 = vld [vmem:[#allocation8 + $0xb8] sm:$0xf]
        %v532 = vld [vmem:[#allocation8 + $0xbc] sm:$0xf]
        %v533 = vld [vmem:[%s4] sm:$0x1]
        %v535 = vlaneseq
        %v536 = vshrl.u32 %v535, 7
        %v537 = vsub.s32 0, %v536
        %v538 = vrot.slane %v533, %v537
        %v588 = vunpack.c.l.b16 %v485
        %v589 = vunpack.c.l.b16 %v486
        %v590 = vunpack.c.l.b16 %v487
        %v591 = vunpack.c.l.b16 %v488
        %v592 = vunpack.c.l.b16 %v489
        %v593 = vunpack.c.l.b16 %v490
        %v594 = vunpack.c.l.b16 %v491
        %v595 = vunpack.c.l.b16 %v492
        %v596 = vunpack.c.l.b16 %v493
        %v597 = vunpack.c.l.b16 %v494
        %v598 = vunpack.c.l.b16 %v495
        %v599 = vunpack.c.l.b16 %v496
        %v600 = vunpack.c.l.b16 %v497
        %v601 = vunpack.c.l.b16 %v498
        %v602 = vunpack.c.l.b16 %v499
        %v603 = vunpack.c.l.b16 %v500
        %v604 = vunpack.c.l.b16 %v501
        %v605 = vunpack.c.l.b16 %v502
        %v606 = vunpack.c.l.b16 %v503
        %v607 = vunpack.c.l.b16 %v504
        %v608 = vunpack.c.l.b16 %v505
        %v609 = vunpack.c.l.b16 %v506
        %v610 = vunpack.c.l.b16 %v507
        %v611 = vunpack.c.l.b16 %v508
        %v612 = vunpack.c.l.b16 %v509
        %v613 = vunpack.c.l.b16 %v510
        %v614 = vunpack.c.l.b16 %v511
        %v615 = vunpack.c.l.b16 %v512
        %v616 = vunpack.c.l.b16 %v513
        %v617 = vunpack.c.l.b16 %v514
        %v618 = vunpack.c.l.b16 %v515
        %v619 = vunpack.c.l.b16 %v516
        %v620 = vunpack.c.l.b16 %v517
        %v621 = vunpack.c.l.b16 %v518
        %v622 = vunpack.c.l.b16 %v519
        %v623 = vunpack.c.l.b16 %v520
        %v624 = vunpack.c.l.b16 %v521
        %v625 = vunpack.c.l.b16 %v522
        %v626 = vunpack.c.l.b16 %v523
        %v627 = vunpack.c.l.b16 %v524
        %v628 = vunpack.c.l.b16 %v525
        %v629 = vunpack.c.l.b16 %v526
        %v630 = vunpack.c.l.b16 %v527
        %v631 = vunpack.c.l.b16 %v528
        %v632 = vunpack.c.l.b16 %v529
        %v633 = vunpack.c.l.b16 %v530
        %v634 = vunpack.c.l.b16 %v531
        %v635 = vunpack.c.l.b16 %v532
        %v636 = vpack.c.b16 %v589, %v588
        %v637 = vpack.c.b16 %v591, %v590
        %v638 = vpack.c.b16 %v593, %v592
        %v639 = vpack.c.b16 %v595, %v594
        %v640 = vpack.c.b16 %v597, %v596
        %v641 = vpack.c.b16 %v599, %v598
        %v642 = vpack.c.b16 %v601, %v600
        %v643 = vpack.c.b16 %v603, %v602
        %v644 = vpack.c.b16 %v605, %v604
        %v645 = vpack.c.b16 %v607, %v606
        %v646 = vpack.c.b16 %v609, %v608
        %v647 = vpack.c.b16 %v611, %v610
        %v648 = vpack.c.b16 %v613, %v612
        %v649 = vpack.c.b16 %v615, %v614
        %v650 = vpack.c.b16 %v617, %v616
        %v651 = vpack.c.b16 %v619, %v618
        %v652 = vpack.c.b16 %v621, %v620
        %v653 = vpack.c.b16 %v623, %v622
        %v654 = vpack.c.b16 %v625, %v624
        %v655 = vpack.c.b16 %v627, %v626
        %v656 = vpack.c.b16 %v629, %v628
        %v657 = vpack.c.b16 %v631, %v630
        %v658 = vpack.c.b16 %v633, %v632
        %v659 = vpack.c.b16 %v635, %v634
        %684 = vmatprep.subr.bf16.mxu0 0
        %685 = vmatpush1.bf16.msra.mxu0 %v636
        %686 = vmatprep.subr.bf16.mxu0 0
        %687 = vmatpush1.bf16.msra.mxu0 %v637
        %688 = vmatprep.subr.bf16.mxu0 0
        %689 = vmatpush1.bf16.msra.mxu0 %v638
        %690 = vmatprep.subr.bf16.mxu0 0
        %691 = vmatpush1.bf16.msra.mxu0 %v639
        %692 = vmatprep.subr.bf16.mxu0 0
        %693 = vmatpush1.bf16.msra.mxu0 %v640
        %694 = vmatprep.subr.bf16.mxu0 0
        %695 = vmatpush1.bf16.msra.mxu0 %v641
        %696 = vmatprep.subr.bf16.mxu0 0
        %697 = vmatpush1.bf16.msra.mxu0 %v642
        %698 = vmatprep.subr.bf16.mxu0 0
        %699 = vmatpush1.bf16.msra.mxu0 %v643
        %700 = vmatprep.subr.bf16.mxu0 0
        %701 = vmatpush1.bf16.msra.mxu0 %v644
        %702 = vmatprep.subr.bf16.mxu0 0
        %703 = vmatpush1.bf16.msra.mxu0 %v645
        %704 = vmatprep.subr.bf16.mxu0 0
        %705 = vmatpush1.bf16.msra.mxu0 %v646
        %706 = vmatprep.subr.bf16.mxu0 0
        %707 = vmatpush1.bf16.msra.mxu0 %v647
        %708 = vmatprep.subr.bf16.mxu0 0
        %709 = vmatpush1.bf16.msra.mxu0 %v648
        %710 = vmatprep.subr.bf16.mxu0 0
        %711 = vmatpush1.bf16.msra.mxu0 %v649
        %712 = vmatprep.subr.bf16.mxu0 0
        %713 = vmatpush1.bf16.msra.mxu0 %v650
        %714 = vmatprep.subr.bf16.mxu0 0
        %715 = vmatpush1.bf16.msra.mxu0 %v651
        %716 = vmatprep.mubr.bf16.mxu0 %v483
        %717 = vmatmul.mubr.bf16.gmra.mrb[0].mxu0 %v482
        %v718 = vpop.f32.mrb[0].mxu0
        %v719 = vadd.f32 %v538, %v718
        %v720 = vpop.f32.mrb[0].mxu0
        %v721 = vpop.f32.mrb[0].mxu0
        %v722 = vadd.f32 %v538, %v721
        %v723 = vpop.f32.mrb[0].mxu0
        %724 = vdwg.mxu0
        %725 = vmatprep.subr.bf16.mxu0 0
        %726 = vmatpush1.bf16.msra.mxu0 %v652
        %727 = vmatprep.subr.bf16.mxu0 0
        %728 = vmatpush1.bf16.msra.mxu0 %v653
        %729 = vmatprep.subr.bf16.mxu0 0
        %730 = vmatpush1.bf16.msra.mxu0 %v654
        %731 = vmatprep.subr.bf16.mxu0 0
        %732 = vmatpush1.bf16.msra.mxu0 %v655
        %733 = vmatprep.subr.bf16.mxu0 0
        %734 = vmatpush1.bf16.msra.mxu0 %v656
        %735 = vmatprep.subr.bf16.mxu0 0
        %736 = vmatpush1.bf16.msra.mxu0 %v657
        %737 = vmatprep.subr.bf16.mxu0 0
        %738 = vmatpush1.bf16.msra.mxu0 %v658
        %739 = vmatprep.subr.bf16.mxu0 0
        %740 = vmatpush1.bf16.msra.mxu0 %v659
        %741 = vmatprep.subr.bf16.mxu0 0
        %742 = vmatpush1.bf16.msra.mxu0 0
        %743 = vmatprep.subr.bf16.mxu0 0
        %744 = vmatpush1.bf16.msra.mxu0 0
        %745 = vmatprep.subr.bf16.mxu0 0
        %746 = vmatpush1.bf16.msra.mxu0 0
        %747 = vmatprep.subr.bf16.mxu0 0
        %748 = vmatpush1.bf16.msra.mxu0 0
        %749 = vmatprep.subr.bf16.mxu0 0
        %750 = vmatpush1.bf16.msra.mxu0 0
        %751 = vmatprep.subr.bf16.mxu0 0
        %752 = vmatpush1.bf16.msra.mxu0 0
        %753 = vmatprep.subr.bf16.mxu0 0
        %754 = vmatpush1.bf16.msra.mxu0 0
        %755 = vmatprep.subr.bf16.mxu0 0
        %756 = vmatpush1.bf16.msra.mxu0 0
        %757 = vmatprep.mubr.bf16.mxu0 0
        %758 = vmatmul.mubr.bf16.gmra.mrb[0].mxu0 %v484
        %v759 = vpop.f32.mrb[0].mxu0
        %v760 = vadd.f32 %v719, %v759
        %v761 = vpop.f32.mrb[0].mxu0
        %v762 = vpop.f32.mrb[0].mxu0
        %v763 = vadd.f32 %v722, %v762
        %v764 = vpop.f32.mrb[0].mxu0
        %765 = vdwg.mxu0
        %v766 = vmax.f32 %v760, 0.0
        %v767 = vmax.f32 %v763, 0.0
        %v768 = vadd.f32 %v429, %v766
        %v769 = vadd.f32 %v432, %v767
        %v770 = vrot.slane %v768, 7
        %v771 = vrot.slane %v769, 7
        %v772 = vsel %vm468, %v770, %v771
        %v773 = vsel %vm468, %v771, %v770
        %v774 = vsel %vm464, %v773, 0.0
        %v775 = vsel %vm465, %v772, 0.0
        %v776 = vrot.slane %v768, 1
        %v777 = vrot.slane %v769, 1
        %v778 = vsel %vm477, %v776, %v777
        %v779 = vsel %vm477, %v777, %v776
        %v780 = vsel %vm473, %v778, 0.0
        %v781 = vsel %vm474, %v779, 0.0
        %v782 = vpack.c.bf16 %v775, %v774
        %v783 = vpack.c.bf16 %v769, %v768
        %v784 = vpack.c.bf16 %v781, %v780
        %785 = vmatprep.subr.bf16.mxu0 0
        %786 = vmatpush1.bf16.msra.mxu0 %v636
        %787 = vmatprep.subr.bf16.mxu0 0
        %788 = vmatpush1.bf16.msra.mxu0 %v637
        %789 = vmatprep.subr.bf16.mxu0 0
        %790 = vmatpush1.bf16.msra.mxu0 %v638
        %791 = vmatprep.subr.bf16.mxu0 0
        %792 = vmatpush1.bf16.msra.mxu0 %v639
        %793 = vmatprep.subr.bf16.mxu0 0
        %794 = vmatpush1.bf16.msra.mxu0 %v640
        %795 = vmatprep.subr.bf16.mxu0 0
        %796 = vmatpush1.bf16.msra.mxu0 %v641
        %797 = vmatprep.subr.bf16.mxu0 0
        %798 = vmatpush1.bf16.msra.mxu0 %v642
        %799 = vmatprep.subr.bf16.mxu0 0
        %800 = vmatpush1.bf16.msra.mxu0 %v643
        %801 = vmatprep.subr.bf16.mxu0 0
        %802 = vmatpush1.bf16.msra.mxu0 %v644
        %803 = vmatprep.subr.bf16.mxu0 0
        %804 = vmatpush1.bf16.msra.mxu0 %v645
        %805 = vmatprep.subr.bf16.mxu0 0
        %806 = vmatpush1.bf16.msra.mxu0 %v646
        %807 = vmatprep.subr.bf16.mxu0 0
        %808 = vmatpush1.bf16.msra.mxu0 %v647
        %809 = vmatprep.subr.bf16.mxu0 0
        %810 = vmatpush1.bf16.msra.mxu0 %v648
        %811 = vmatprep.subr.bf16.mxu0 0
        %812 = vmatpush1.bf16.msra.mxu0 %v649
        %813 = vmatprep.subr.bf16.mxu0 0
        %814 = vmatpush1.bf16.msra.mxu0 %v650
        %815 = vmatprep.subr.bf16.mxu0 0
        %816 = vmatpush1.bf16.msra.mxu0 %v651
        %817 = vmatprep.mubr.bf16.mxu0 %v783
        %818 = vmatmul.mubr.bf16.gmra.mrb[0].mxu0 %v782
        %v819 = vpop.f32.mrb[0].mxu0
        %v820 = vadd.f32 %v538, %v819
        %v821 = vpop.f32.mrb[0].mxu0
        %v822 = vpop.f32.mrb[0].mxu0
        %v823 = vadd.f32 %v538, %v822
        %v824 = vpop.f32.mrb[0].mxu0
        %825 = vdwg.mxu0
        %826 = vmatprep.subr.bf16.mxu0 0
        %827 = vmatpush1.bf16.msra.mxu0 %v652
        %828 = vmatprep.subr.bf16.mxu0 0
        %829 = vmatpush1.bf16.msra.mxu0 %v653
        %830 = vmatprep.subr.bf16.mxu0 0
        %831 = vmatpush1.bf16.msra.mxu0 %v654
        %832 = vmatprep.subr.bf16.mxu0 0
        %833 = vmatpush1.bf16.msra.mxu0 %v655
        %834 = vmatprep.subr.bf16.mxu0 0
        %835 = vmatpush1.bf16.msra.mxu0 %v656
        %836 = vmatprep.subr.bf16.mxu0 0
        %837 = vmatpush1.bf16.msra.mxu0 %v657
        %838 = vmatprep.subr.bf16.mxu0 0
        %839 = vmatpush1.bf16.msra.mxu0 %v658
        %840 = vmatprep.subr.bf16.mxu0 0
        %841 = vmatpush1.bf16.msra.mxu0 %v659
        %842 = vmatprep.subr.bf16.mxu0 0
        %843 = vmatpush1.bf16.msra.mxu0 0
        %844 = vmatprep.subr.bf16.mxu0 0
        %845 = vmatpush1.bf16.msra.mxu0 0
        %846 = vmatprep.subr.bf16.mxu0 0
        %847 = vmatpush1.bf16.msra.mxu0 0
        %848 = vmatprep.subr.bf16.mxu0 0
        %849 = vmatpush1.bf16.msra.mxu0 0
        %850 = vmatprep.subr.bf16.mxu0 0
        %851 = vmatpush1.bf16.msra.mxu0 0
        %852 = vmatprep.subr.bf16.mxu0 0
        %853 = vmatpush1.bf16.msra.mxu0 0
        %854 = vmatprep.subr.bf16.mxu0 0
        %855 = vmatpush1.bf16.msra.mxu0 0
        %856 = vmatprep.subr.bf16.mxu0 0
        %857 = vmatpush1.bf16.msra.mxu0 0
        %858 = vmatprep.mubr.bf16.mxu0 0
        %859 = vmatmul.mubr.bf16.gmra.mrb[0].mxu0 %v784
        %v860 = vpop.f32.mrb[0].mxu0
        %v861 = vadd.f32 %v820, %v860
        %v862 = vpop.f32.mrb[0].mxu0
        %v863 = vpop.f32.mrb[0].mxu0
        %v864 = vadd.f32 %v823, %v863
        %v865 = vpop.f32.mrb[0].mxu0
        %866 = vdwg.mxu0
        %v867 = vmax.f32 %v861, 0.0
        %v868 = vmax.f32 %v864, 0.0
        %v869 = vadd.f32 %v429, %v867
        %v870 = vadd.f32 %v432, %v868
        %v871 = vrot.slane %v869, 7
        %v872 = vrot.slane %v870, 7
        %v873 = vsel %vm468, %v871, %v872
        %v874 = vsel %vm468, %v872, %v871
        %v875 = vsel %vm464, %v874, 0.0
        %v876 = vsel %vm465, %v873, 0.0
        %v877 = vrot.slane %v869, 1
        %v878 = vrot.slane %v870, 1
        %v879 = vsel %vm477, %v877, %v878
        %v880 = vsel %vm477, %v878, %v877
        %v881 = vsel %vm473, %v879, 0.0
        %v882 = vsel %vm474, %v880, 0.0
        %v883 = vpack.c.bf16 %v876, %v875
        %v884 = vpack.c.bf16 %v870, %v869
        %v885 = vpack.c.bf16 %v882, %v881
        %886 = vmatprep.subr.bf16.mxu0 0
        %887 = vmatpush1.bf16.msra.mxu0 %v636
        %888 = vmatprep.subr.bf16.mxu0 0
        %889 = vmatpush1.bf16.msra.mxu0 %v637
        %890 = vmatprep.subr.bf16.mxu0 0
        %891 = vmatpush1.bf16.msra.mxu0 %v638
        %892 = vmatprep.subr.bf16.mxu0 0
        %893 = vmatpush1.bf16.msra.mxu0 %v639
        %894 = vmatprep.subr.bf16.mxu0 0
        %895 = vmatpush1.bf16.msra.mxu0 %v640
        %896 = vmatprep.subr.bf16.mxu0 0
        %897 = vmatpush1.bf16.msra.mxu0 %v641
        %898 = vmatprep.subr.bf16.mxu0 0
        %899 = vmatpush1.bf16.msra.mxu0 %v642
        %900 = vmatprep.subr.bf16.mxu0 0
        %901 = vmatpush1.bf16.msra.mxu0 %v643
        %902 = vmatprep.subr.bf16.mxu0 0
        %903 = vmatpush1.bf16.msra.mxu0 %v644
        %904 = vmatprep.subr.bf16.mxu0 0
        %905 = vmatpush1.bf16.msra.mxu0 %v645
        %906 = vmatprep.subr.bf16.mxu0 0
        %907 = vmatpush1.bf16.msra.mxu0 %v646
        %908 = vmatprep.subr.bf16.mxu0 0
        %909 = vmatpush1.bf16.msra.mxu0 %v647
        %910 = vmatprep.subr.bf16.mxu0 0
        %911 = vmatpush1.bf16.msra.mxu0 %v648
        %912 = vmatprep.subr.bf16.mxu0 0
        %913 = vmatpush1.bf16.msra.mxu0 %v649
        %914 = vmatprep.subr.bf16.mxu0 0
        %915 = vmatpush1.bf16.msra.mxu0 %v650
        %916 = vmatprep.subr.bf16.mxu0 0
        %917 = vmatpush1.bf16.msra.mxu0 %v651
        %918 = vmatprep.mubr.bf16.mxu0 %v884
        %919 = vmatmul.mubr.bf16.gmra.mrb[0].mxu0 %v883
        %v920 = vpop.f32.mrb[0].mxu0
        %v921 = vadd.f32 %v538, %v920
        %v922 = vpop.f32.mrb[0].mxu0
        %v923 = vpop.f32.mrb[0].mxu0
        %v924 = vadd.f32 %v538, %v923
        %v925 = vpop.f32.mrb[0].mxu0
        %926 = vdwg.mxu0
        %927 = vmatprep.subr.bf16.mxu0 0
        %928 = vmatpush1.bf16.msra.mxu0 %v652
        %929 = vmatprep.subr.bf16.mxu0 0
        %930 = vmatpush1.bf16.msra.mxu0 %v653
        %931 = vmatprep.subr.bf16.mxu0 0
        %932 = vmatpush1.bf16.msra.mxu0 %v654
        %933 = vmatprep.subr.bf16.mxu0 0
        %934 = vmatpush1.bf16.msra.mxu0 %v655
        %935 = vmatprep.subr.bf16.mxu0 0
        %936 = vmatpush1.bf16.msra.mxu0 %v656
        %937 = vmatprep.subr.bf16.mxu0 0
        %938 = vmatpush1.bf16.msra.mxu0 %v657
        %939 = vmatprep.subr.bf16.mxu0 0
        %940 = vmatpush1.bf16.msra.mxu0 %v658
        %941 = vmatprep.subr.bf16.mxu0 0
        %942 = vmatpush1.bf16.msra.mxu0 %v659
        %943 = vmatprep.subr.bf16.mxu0 0
        %944 = vmatpush1.bf16.msra.mxu0 0
        %945 = vmatprep.subr.bf16.mxu0 0
        %946 = vmatpush1.bf16.msra.mxu0 0
        %947 = vmatprep.subr.bf16.mxu0 0
        %948 = vmatpush1.bf16.msra.mxu0 0
        %949 = vmatprep.subr.bf16.mxu0 0
        %950 = vmatpush1.bf16.msra.mxu0 0
        %951 = vmatprep.subr.bf16.mxu0 0
        %952 = vmatpush1.bf16.msra.mxu0 0
        %953 = vmatprep.subr.bf16.mxu0 0
        %954 = vmatpush1.bf16.msra.mxu0 0
        %955 = vmatprep.subr.bf16.mxu0 0
        %956 = vmatpush1.bf16.msra.mxu0 0
        %957 = vmatprep.subr.bf16.mxu0 0
        %958 = vmatpush1.bf16.msra.mxu0 0
        %959 = vmatprep.mubr.bf16.mxu0 0
        %960 = vmatmul.mubr.bf16.gmra.mrb[0].mxu0 %v885
        %v961 = vpop.f32.mrb[0].mxu0
        %v962 = vadd.f32 %v921, %v961
        %v963 = vpop.f32.mrb[0].mxu0
        %v964 = vpop.f32.mrb[0].mxu0
        %v965 = vadd.f32 %v924, %v964
        %v966 = vpop.f32.mrb[0].mxu0
        %967 = vdwg.mxu0
        %v968 = vmax.f32 %v962, 0.0
        %v969 = vmax.f32 %v965, 0.0
        %v970 = vrot.slane %v968, 7
        %v971 = vrot.slane %v969, 7
        %v972 = vsel %vm468, %v970, %v971
        %v973 = vsel %vm468, %v971, %v970
        %v974 = vsel %vm464, %v973, 0.0
        %v975 = vsel %vm465, %v972, 0.0
        %v976 = vrot.slane %v968, 1
        %v977 = vrot.slane %v969, 1
        %v978 = vsel %vm477, %v976, %v977
        %v979 = vsel %vm477, %v977, %v976
        %v980 = vsel %vm473, %v978, 0.0
        %v981 = vsel %vm474, %v979, 0.0
        %v982 = vpack.c.bf16 %v975, %v974
        %v983 = vpack.c.bf16 %v969, %v968
        %v984 = vpack.c.bf16 %v981, %v980
        %v985 = vld [vmem:[#allocation9] sm:$0xf]
        %v986 = vld [vmem:[#allocation9 + $0x4] sm:$0xf]
        %v987 = vld [vmem:[#allocation9 + $0x8] sm:$0xf]
        %v988 = vld [vmem:[#allocation9 + $0xc] sm:$0xf]
        %v989 = vld [vmem:[#allocation9 + $0x10] sm:$0xf]
        %v990 = vld [vmem:[#allocation9 + $0x14] sm:$0xf]
        %v991 = vld [vmem:[#allocation9 + $0x18] sm:$0xf]
        %v992 = vld [vmem:[#allocation9 + $0x1c] sm:$0xf]
        %v993 = vld [vmem:[#allocation9 + $0x20] sm:$0xf]
        %v994 = vld [vmem:[#allocation9 + $0x24] sm:$0xf]
        %v995 = vld [vmem:[#allocation9 + $0x28] sm:$0xf]
        %v996 = vld [vmem:[#allocation9 + $0x2c] sm:$0xf]
        %v997 = vld [vmem:[#allocation9 + $0x30] sm:$0xf]
        %v998 = vld [vmem:[#allocation9 + $0x34] sm:$0xf]
        %v999 = vld [vmem:[#allocation9 + $0x38] sm:$0xf]
        %v1000 = vld [vmem:[#allocation9 + $0x3c] sm:$0xf]
        %v1001 = vld [vmem:[#allocation9 + $0x40] sm:$0xf]
        %v1002 = vld [vmem:[#allocation9 + $0x44] sm:$0xf]
        %v1003 = vld [vmem:[#allocation9 + $0x48] sm:$0xf]
        %v1004 = vld [vmem:[#allocation9 + $0x4c] sm:$0xf]
        %v1005 = vld [vmem:[#allocation9 + $0x50] sm:$0xf]
        %v1006 = vld [vmem:[#allocation9 + $0x54] sm:$0xf]
        %v1007 = vld [vmem:[#allocation9 + $0x58] sm:$0xf]
        %v1008 = vld [vmem:[#allocation9 + $0x5c] sm:$0xf]
        %v1009 = vld [vmem:[#allocation9 + $0x60] sm:$0xf]
        %v1010 = vld [vmem:[#allocation9 + $0x64] sm:$0xf]
        %v1011 = vld [vmem:[#allocation9 + $0x68] sm:$0xf]
        %v1012 = vld [vmem:[#allocation9 + $0x6c] sm:$0xf]
        %v1013 = vld [vmem:[#allocation9 + $0x70] sm:$0xf]
        %v1014 = vld [vmem:[#allocation9 + $0x74] sm:$0xf]
        %v1015 = vld [vmem:[#allocation9 + $0x78] sm:$0xf]
        %v1016 = vld [vmem:[#allocation9 + $0x7c] sm:$0xf]
        %v1017 = vld [vmem:[#allocation9 + $0x80] sm:$0xf]
        %v1018 = vld [vmem:[#allocation9 + $0x84] sm:$0xf]
        %v1019 = vld [vmem:[#allocation9 + $0x88] sm:$0xf]
        %v1020 = vld [vmem:[#allocation9 + $0x8c] sm:$0xf]
        %v1021 = vld [vmem:[#allocation9 + $0x90] sm:$0xf]
        %v1022 = vld [vmem:[#allocation9 + $0x94] sm:$0xf]
        %v1023 = vld [vmem:[#allocation9 + $0x98] sm:$0xf]
        %v1024 = vld [vmem:[#allocation9 + $0x9c] sm:$0xf]
        %v1025 = vld [vmem:[#allocation9 + $0xa0] sm:$0xf]
        %v1026 = vld [vmem:[#allocation9 + $0xa4] sm:$0xf]
        %v1027 = vld [vmem:[#allocation9 + $0xa8] sm:$0xf]
        %v1028 = vld [vmem:[#allocation9 + $0xac] sm:$0xf]
        %v1029 = vld [vmem:[#allocation9 + $0xb0] sm:$0xf]
        %v1030 = vld [vmem:[#allocation9 + $0xb4] sm:$0xf]
        %v1031 = vld [vmem:[#allocation9 + $0xb8] sm:$0xf]
        %v1032 = vld [vmem:[#allocation9 + $0xbc] sm:$0xf]
        %v1033 = vld [vmem:[%s6] sm:$0x1]
        %v1035 = vlaneseq
        %v1036 = vshrl.u32 %v1035, 7
        %v1037 = vsub.s32 0, %v1036
        %v1038 = vrot.slane %v1033, %v1037
        %v1088 = vunpack.c.l.b16 %v985
        %v1089 = vunpack.c.l.b16 %v986
        %v1090 = vunpack.c.l.b16 %v987
        %v1091 = vunpack.c.l.b16 %v988
        %v1092 = vunpack.c.l.b16 %v989
        %v1093 = vunpack.c.l.b16 %v990
        %v1094 = vunpack.c.l.b16 %v991
        %v1095 = vunpack.c.l.b16 %v992
        %v1096 = vunpack.c.l.b16 %v993
        %v1097 = vunpack.c.l.b16 %v994
        %v1098 = vunpack.c.l.b16 %v995
        %v1099 = vunpack.c.l.b16 %v996
        %v1100 = vunpack.c.l.b16 %v997
        %v1101 = vunpack.c.l.b16 %v998
        %v1102 = vunpack.c.l.b16 %v999
        %v1103 = vunpack.c.l.b16 %v1000
        %v1104 = vunpack.c.l.b16 %v1001
        %v1105 = vunpack.c.l.b16 %v1002
        %v1106 = vunpack.c.l.b16 %v1003
        %v1107 = vunpack.c.l.b16 %v1004
        %v1108 = vunpack.c.l.b16 %v1005
        %v1109 = vunpack.c.l.b16 %v1006
        %v1110 = vunpack.c.l.b16 %v1007
        %v1111 = vunpack.c.l.b16 %v1008
        %v1112 = vunpack.c.l.b16 %v1009
        %v1113 = vunpack.c.l.b16 %v1010
        %v1114 = vunpack.c.l.b16 %v1011
        %v1115 = vunpack.c.l.b16 %v1012
        %v1116 = vunpack.c.l.b16 %v1013
        %v1117 = vunpack.c.l.b16 %v1014
        %v1118 = vunpack.c.l.b16 %v1015
        %v1119 = vunpack.c.l.b16 %v1016
        %v1120 = vunpack.c.l.b16 %v1017
        %v1121 = vunpack.c.l.b16 %v1018
        %v1122 = vunpack.c.l.b16 %v1019
        %v1123 = vunpack.c.l.b16 %v1020
        %v1124 = vunpack.c.l.b16 %v1021
        %v1125 = vunpack.c.l.b16 %v1022
        %v1126 = vunpack.c.l.b16 %v1023
        %v1127 = vunpack.c.l.b16 %v1024
        %v1128 = vunpack.c.l.b16 %v1025
        %v1129 = vunpack.c.l.b16 %v1026
        %v1130 = vunpack.c.l.b16 %v1027
        %v1131 = vunpack.c.l.b16 %v1028
        %v1132 = vunpack.c.l.b16 %v1029
        %v1133 = vunpack.c.l.b16 %v1030
        %v1134 = vunpack.c.l.b16 %v1031
        %v1135 = vunpack.c.l.b16 %v1032
        %v1136 = vpack.c.b16 %v1089, %v1088
        %v1137 = vpack.c.b16 %v1091, %v1090
        %v1138 = vpack.c.b16 %v1093, %v1092
        %v1139 = vpack.c.b16 %v1095, %v1094
        %v1140 = vpack.c.b16 %v1097, %v1096
        %v1141 = vpack.c.b16 %v1099, %v1098
        %v1142 = vpack.c.b16 %v1101, %v1100
        %v1143 = vpack.c.b16 %v1103, %v1102
        %v1144 = vpack.c.b16 %v1105, %v1104
        %v1145 = vpack.c.b16 %v1107, %v1106
        %v1146 = vpack.c.b16 %v1109, %v1108
        %v1147 = vpack.c.b16 %v1111, %v1110
        %v1148 = vpack.c.b16 %v1113, %v1112
        %v1149 = vpack.c.b16 %v1115, %v1114
        %v1150 = vpack.c.b16 %v1117, %v1116
        %v1151 = vpack.c.b16 %v1119, %v1118
        %v1152 = vpack.c.b16 %v1121, %v1120
        %v1153 = vpack.c.b16 %v1123, %v1122
        %v1154 = vpack.c.b16 %v1125, %v1124
        %v1155 = vpack.c.b16 %v1127, %v1126
        %v1156 = vpack.c.b16 %v1129, %v1128
        %v1157 = vpack.c.b16 %v1131, %v1130
        %v1158 = vpack.c.b16 %v1133, %v1132
        %v1159 = vpack.c.b16 %v1135, %v1134
        %1184 = vmatprep.subr.bf16.mxu0 0
        %1185 = vmatpush1.bf16.msra.mxu0 %v1136
        %1186 = vmatprep.subr.bf16.mxu0 0
        %1187 = vmatpush1.bf16.msra.mxu0 %v1137
        %1188 = vmatprep.subr.bf16.mxu0 0
        %1189 = vmatpush1.bf16.msra.mxu0 %v1138
        %1190 = vmatprep.subr.bf16.mxu0 0
        %1191 = vmatpush1.bf16.msra.mxu0 %v1139
        %1192 = vmatprep.subr.bf16.mxu0 0
        %1193 = vmatpush1.bf16.msra.mxu0 %v1140
        %1194 = vmatprep.subr.bf16.mxu0 0
        %1195 = vmatpush1.bf16.msra.mxu0 %v1141
        %1196 = vmatprep.subr.bf16.mxu0 0
        %1197 = vmatpush1.bf16.msra.mxu0 %v1142
        %1198 = vmatprep.subr.bf16.mxu0 0
        %1199 = vmatpush1.bf16.msra.mxu0 %v1143
        %1200 = vmatprep.subr.bf16.mxu0 0
        %1201 = vmatpush1.bf16.msra.mxu0 %v1144
        %1202 = vmatprep.subr.bf16.mxu0 0
        %1203 = vmatpush1.bf16.msra.mxu0 %v1145
        %1204 = vmatprep.subr.bf16.mxu0 0
        %1205 = vmatpush1.bf16.msra.mxu0 %v1146
        %1206 = vmatprep.subr.bf16.mxu0 0
        %1207 = vmatpush1.bf16.msra.mxu0 %v1147
        %1208 = vmatprep.subr.bf16.mxu0 0
        %1209 = vmatpush1.bf16.msra.mxu0 %v1148
        %1210 = vmatprep.subr.bf16.mxu0 0
        %1211 = vmatpush1.bf16.msra.mxu0 %v1149
        %1212 = vmatprep.subr.bf16.mxu0 0
        %1213 = vmatpush1.bf16.msra.mxu0 %v1150
        %1214 = vmatprep.subr.bf16.mxu0 0
        %1215 = vmatpush1.bf16.msra.mxu0 %v1151
        %1216 = vmatprep.mubr.bf16.mxu0 %v983
        %1217 = vmatmul.mubr.bf16.gmra.mrb[0].mxu0 %v982
        %v1218 = vpop.f32.mrb[0].mxu0
        %v1219 = vadd.f32 %v1038, %v1218
        %v1220 = vpop.f32.mrb[0].mxu0
        %v1221 = vpop.f32.mrb[0].mxu0
        %v1222 = vadd.f32 %v1038, %v1221
        %v1223 = vpop.f32.mrb[0].mxu0
        %1224 = vdwg.mxu0
        %1225 = vmatprep.subr.bf16.mxu0 0
        %1226 = vmatpush1.bf16.msra.mxu0 %v1152
        %1227 = vmatprep.subr.bf16.mxu0 0
        %1228 = vmatpush1.bf16.msra.mxu0 %v1153
        %1229 = vmatprep.subr.bf16.mxu0 0
        %1230 = vmatpush1.bf16.msra.mxu0 %v1154
        %1231 = vmatprep.subr.bf16.mxu0 0
        %1232 = vmatpush1.bf16.msra.mxu0 %v1155
        %1233 = vmatprep.subr.bf16.mxu0 0
        %1234 = vmatpush1.bf16.msra.mxu0 %v1156
        %1235 = vmatprep.subr.bf16.mxu0 0
        %1236 = vmatpush1.bf16.msra.mxu0 %v1157
        %1237 = vmatprep.subr.bf16.mxu0 0
        %1238 = vmatpush1.bf16.msra.mxu0 %v1158
        %1239 = vmatprep.subr.bf16.mxu0 0
        %1240 = vmatpush1.bf16.msra.mxu0 %v1159
        %1241 = vmatprep.subr.bf16.mxu0 0
        %1242 = vmatpush1.bf16.msra.mxu0 0
        %1243 = vmatprep.subr.bf16.mxu0 0
        %1244 = vmatpush1.bf16.msra.mxu0 0
        %1245 = vmatprep.subr.bf16.mxu0 0
        %1246 = vmatpush1.bf16.msra.mxu0 0
        %1247 = vmatprep.subr.bf16.mxu0 0
        %1248 = vmatpush1.bf16.msra.mxu0 0
        %1249 = vmatprep.subr.bf16.mxu0 0
        %1250 = vmatpush1.bf16.msra.mxu0 0
        %1251 = vmatprep.subr.bf16.mxu0 0
        %1252 = vmatpush1.bf16.msra.mxu0 0
        %1253 = vmatprep.subr.bf16.mxu0 0
        %1254 = vmatpush1.bf16.msra.mxu0 0
        %1255 = vmatprep.subr.bf16.mxu0 0
        %1256 = vmatpush1.bf16.msra.mxu0 0
        %1257 = vmatprep.mubr.bf16.mxu0 0
        %1258 = vmatmul.mubr.bf16.gmra.mrb[0].mxu0 %v984
        %v1259 = vpop.f32.mrb[0].mxu0
        %v1260 = vadd.f32 %v1219, %v1259
        %v1261 = vpop.f32.mrb[0].mxu0
        %v1262 = vpop.f32.mrb[0].mxu0
        %v1263 = vadd.f32 %v1222, %v1262
        %v1264 = vpop.f32.mrb[0].mxu0
        %1265 = vdwg.mxu0
        %v1266 = vmax.f32 %v1260, 0.0
        %v1267 = vmax.f32 %v1263, 0.0
        %v1268 = vadd.f32 %v968, %v1266
        %v1269 = vadd.f32 %v969, %v1267
        %v1270 = vrot.slane %v1268, 7
        %v1271 = vrot.slane %v1269, 7
        %v1272 = vsel %vm468, %v1270, %v1271
        %v1273 = vsel %vm468, %v1271, %v1270
        %v1274 = vsel %vm464, %v1273, 0.0
        %v1275 = vsel %vm465, %v1272, 0.0
        %v1276 = vrot.slane %v1268, 1
        %v1277 = vrot.slane %v1269, 1
        %v1278 = vsel %vm477, %v1276, %v1277
        %v1279 = vsel %vm477, %v1277, %v1276
        %v1280 = vsel %vm473, %v1278, 0.0
        %v1281 = vsel %vm474, %v1279, 0.0
        %v1282 = vpack.c.bf16 %v1275, %v1274
        %v1283 = vpack.c.bf16 %v1269, %v1268
        %v1284 = vpack.c.bf16 %v1281, %v1280
        %1285 = vmatprep.subr.bf16.mxu0 0
        %1286 = vmatpush1.bf16.msra.mxu0 %v1136
        %1287 = vmatprep.subr.bf16.mxu0 0
        %1288 = vmatpush1.bf16.msra.mxu0 %v1137
        %1289 = vmatprep.subr.bf16.mxu0 0
        %1290 = vmatpush1.bf16.msra.mxu0 %v1138
        %1291 = vmatprep.subr.bf16.mxu0 0
        %1292 = vmatpush1.bf16.msra.mxu0 %v1139
        %1293 = vmatprep.subr.bf16.mxu0 0
        %1294 = vmatpush1.bf16.msra.mxu0 %v1140
        %1295 = vmatprep.subr.bf16.mxu0 0
        %1296 = vmatpush1.bf16.msra.mxu0 %v1141
        %1297 = vmatprep.subr.bf16.mxu0 0
        %1298 = vmatpush1.bf16.msra.mxu0 %v1142
        %1299 = vmatprep.subr.bf16.mxu0 0
        %1300 = vmatpush1.bf16.msra.mxu0 %v1143
        %1301 = vmatprep.subr.bf16.mxu0 0
        %1302 = vmatpush1.bf16.msra.mxu0 %v1144
        %1303 = vmatprep.subr.bf16.mxu0 0
        %1304 = vmatpush1.bf16.msra.mxu0 %v1145
        %1305 = vmatprep.subr.bf16.mxu0 0
        %1306 = vmatpush1.bf16.msra.mxu0 %v1146
        %1307 = vmatprep.subr.bf16.mxu0 0
        %1308 = vmatpush1.bf16.msra.mxu0 %v1147
        %1309 = vmatprep.subr.bf16.mxu0 0
        %1310 = vmatpush1.bf16.msra.mxu0 %v1148
        %1311 = vmatprep.subr.bf16.mxu0 0
        %1312 = vmatpush1.bf16.msra.mxu0 %v1149
        %1313 = vmatprep.subr.bf16.mxu0 0
        %1314 = vmatpush1.bf16.msra.mxu0 %v1150
        %1315 = vmatprep.subr.bf16.mxu0 0
        %1316 = vmatpush1.bf16.msra.mxu0 %v1151
        %1317 = vmatprep.mubr.bf16.mxu0 %v1283
        %1318 = vmatmul.mubr.bf16.gmra.mrb[0].mxu0 %v1282
        %v1319 = vpop.f32.mrb[0].mxu0
        %v1320 = vadd.f32 %v1038, %v1319
        %v1321 = vpop.f32.mrb[0].mxu0
        %v1322 = vpop.f32.mrb[0].mxu0
        %v1323 = vadd.f32 %v1038, %v1322
        %v1324 = vpop.f32.mrb[0].mxu0
        %1325 = vdwg.mxu0
        %1326 = vmatprep.subr.bf16.mxu0 0
        %1327 = vmatpush1.bf16.msra.mxu0 %v1152
        %1328 = vmatprep.subr.bf16.mxu0 0
        %1329 = vmatpush1.bf16.msra.mxu0 %v1153
        %1330 = vmatprep.subr.bf16.mxu0 0
        %1331 = vmatpush1.bf16.msra.mxu0 %v1154
        %1332 = vmatprep.subr.bf16.mxu0 0
        %1333 = vmatpush1.bf16.msra.mxu0 %v1155
        %1334 = vmatprep.subr.bf16.mxu0 0
        %1335 = vmatpush1.bf16.msra.mxu0 %v1156
        %1336 = vmatprep.subr.bf16.mxu0 0
        %1337 = vmatpush1.bf16.msra.mxu0 %v1157
        %1338 = vmatprep.subr.bf16.mxu0 0
        %1339 = vmatpush1.bf16.msra.mxu0 %v1158
        %1340 = vmatprep.subr.bf16.mxu0 0
        %1341 = vmatpush1.bf16.msra.mxu0 %v1159
        %1342 = vmatprep.subr.bf16.mxu0 0
        %1343 = vmatpush1.bf16.msra.mxu0 0
        %1344 = vmatprep.subr.bf16.mxu0 0
        %1345 = vmatpush1.bf16.msra.mxu0 0
        %1346 = vmatprep.subr.bf16.mxu0 0
        %1347 = vmatpush1.bf16.msra.mxu0 0
        %1348 = vmatprep.subr.bf16.mxu0 0
        %1349 = vmatpush1.bf16.msra.mxu0 0
        %1350 = vmatprep.subr.bf16.mxu0 0
        %1351 = vmatpush1.bf16.msra.mxu0 0
        %1352 = vmatprep.subr.bf16.mxu0 0
        %1353 = vmatpush1.bf16.msra.mxu0 0
        %1354 = vmatprep.subr.bf16.mxu0 0
        %1355 = vmatpush1.bf16.msra.mxu0 0
        %1356 = vmatprep.subr.bf16.mxu0 0
        %1357 = vmatpush1.bf16.msra.mxu0 0
        %1358 = vmatprep.mubr.bf16.mxu0 0
        %1359 = vmatmul.mubr.bf16.gmra.mrb[0].mxu0 %v1284
        %v1360 = vpop.f32.mrb[0].mxu0
        %v1361 = vadd.f32 %v1320, %v1360
        %v1362 = vpop.f32.mrb[0].mxu0
        %v1363 = vpop.f32.mrb[0].mxu0
        %v1364 = vadd.f32 %v1323, %v1363
        %v1365 = vpop.f32.mrb[0].mxu0
        %1366 = vdwg.mxu0
        %v1367 = vmax.f32 %v1361, 0.0
        %v1368 = vmax.f32 %v1364, 0.0
        %v1369 = vadd.f32 %v968, %v1367
        %v1370 = vadd.f32 %v969, %v1368
        %v1371 = vrot.slane %v1369, 7
        %v1372 = vrot.slane %v1370, 7
        %v1373 = vsel %vm468, %v1371, %v1372
        %v1374 = vsel %vm468, %v1372, %v1371
        %v1375 = vsel %vm464, %v1374, 0.0
        %v1376 = vsel %vm465, %v1373, 0.0
        %v1377 = vrot.slane %v1369, 1
        %v1378 = vrot.slane %v1370, 1
        %v1379 = vsel %vm477, %v1377, %v1378
        %v1380 = vsel %vm477, %v1378, %v1377
        %v1381 = vsel %vm473, %v1379, 0.0
        %v1382 = vsel %vm474, %v1380, 0.0
        %v1383 = vpack.c.bf16 %v1376, %v1375
        %v1384 = vpack.c.bf16 %v1370, %v1369
        %v1385 = vpack.c.bf16 %v1382, %v1381
        %1386 = vmatprep.subr.bf16.mxu0 0
        %1387 = vmatpush1.bf16.msra.mxu0 %v1136
        %1388 = vmatprep.subr.bf16.mxu0 0
        %1389 = vmatpush1.bf16.msra.mxu0 %v1137
        %1390 = vmatprep.subr.bf16.mxu0 0
        %1391 = vmatpush1.bf16.msra.mxu0 %v1138
        %1392 = vmatprep.subr.bf16.mxu0 0
        %1393 = vmatpush1.bf16.msra.mxu0 %v1139
        %1394 = vmatprep.subr.bf16.mxu0 0
        %1395 = vmatpush1.bf16.msra.mxu0 %v1140
        %1396 = vmatprep.subr.bf16.mxu0 0
        %1397 = vmatpush1.bf16.msra.mxu0 %v1141
        %1398 = vmatprep.subr.bf16.mxu0 0
        %1399 = vmatpush1.bf16.msra.mxu0 %v1142
        %1400 = vmatprep.subr.bf16.mxu0 0
        %1401 = vmatpush1.bf16.msra.mxu0 %v1143
        %1402 = vmatprep.subr.bf16.mxu0 0
        %1403 = vmatpush1.bf16.msra.mxu0 %v1144
        %1404 = vmatprep.subr.bf16.mxu0 0
        %1405 = vmatpush1.bf16.msra.mxu0 %v1145
        %1406 = vmatprep.subr.bf16.mxu0 0
        %1407 = vmatpush1.bf16.msra.mxu0 %v1146
        %1408 = vmatprep.subr.bf16.mxu0 0
        %1409 = vmatpush1.bf16.msra.mxu0 %v1147
        %1410 = vmatprep.subr.bf16.mxu0 0
        %1411 = vmatpush1.bf16.msra.mxu0 %v1148
        %1412 = vmatprep.subr.bf16.mxu0 0
        %1413 = vmatpush1.bf16.msra.mxu0 %v1149
        %1414 = vmatprep.subr.bf16.mxu0 0
        %1415 = vmatpush1.bf16.msra.mxu0 %v1150
        %1416 = vmatprep.subr.bf16.mxu0 0
        %1417 = vmatpush1.bf16.msra.mxu0 %v1151
        %1418 = vmatprep.mubr.bf16.mxu0 %v1384
        %1419 = vmatmul.mubr.bf16.gmra.mrb[0].mxu0 %v1383
        %v1420 = vpop.f32.mrb[0].mxu0
        %v1421 = vadd.f32 %v1038, %v1420
        %v1422 = vpop.f32.mrb[0].mxu0
        %v1423 = vpop.f32.mrb[0].mxu0
        %v1424 = vadd.f32 %v1038, %v1423
        %v1425 = vpop.f32.mrb[0].mxu0
        %1426 = vdwg.mxu0
        %1427 = vmatprep.subr.bf16.mxu0 0
        %1428 = vmatpush1.bf16.msra.mxu0 %v1152
        %1429 = vmatprep.subr.bf16.mxu0 0
        %1430 = vmatpush1.bf16.msra.mxu0 %v1153
        %1431 = vmatprep.subr.bf16.mxu0 0
        %1432 = vmatpush1.bf16.msra.mxu0 %v1154
        %1433 = vmatprep.subr.bf16.mxu0 0
        %1434 = vmatpush1.bf16.msra.mxu0 %v1155
        %1435 = vmatprep.subr.bf16.mxu0 0
        %1436 = vmatpush1.bf16.msra.mxu0 %v1156
        %1437 = vmatprep.subr.bf16.mxu0 0
        %1438 = vmatpush1.bf16.msra.mxu0 %v1157
        %1439 = vmatprep.subr.bf16.mxu0 0
        %1440 = vmatpush1.bf16.msra.mxu0 %v1158
        %1441 = vmatprep.subr.bf16.mxu0 0
        %1442 = vmatpush1.bf16.msra.mxu0 %v1159
        %1443 = vmatprep.subr.bf16.mxu0 0
        %1444 = vmatpush1.bf16.msra.mxu0 0
        %1445 = vmatprep.subr.bf16.mxu0 0
        %1446 = vmatpush1.bf16.msra.mxu0 0
        %1447 = vmatprep.subr.bf16.mxu0 0
        %1448 = vmatpush1.bf16.msra.mxu0 0
        %1449 = vmatprep.subr.bf16.mxu0 0
        %1450 = vmatpush1.bf16.msra.mxu0 0
        %1451 = vmatprep.subr.bf16.mxu0 0
        %1452 = vmatpush1.bf16.msra.mxu0 0
        %1453 = vmatprep.subr.bf16.mxu0 0
        %1454 = vmatpush1.bf16.msra.mxu0 0
        %1455 = vmatprep.subr.bf16.mxu0 0
        %1456 = vmatpush1.bf16.msra.mxu0 0
        %1457 = vmatprep.subr.bf16.mxu0 0
        %1458 = vmatpush1.bf16.msra.mxu0 0
        %1459 = vmatprep.mubr.bf16.mxu0 0
        %1460 = vmatmul.mubr.bf16.gmra.mrb[0].mxu0 %v1385
        %v1461 = vpop.f32.mrb[0].mxu0
        %v1462 = vadd.f32 %v1421, %v1461
        %v1463 = vpop.f32.mrb[0].mxu0
        %v1464 = vpop.f32.mrb[0].mxu0
        %v1465 = vadd.f32 %v1424, %v1464
        %v1466 = vpop.f32.mrb[0].mxu0
        %1467 = vdwg.mxu0
        %v1468 = vmax.f32 %v1462, 0.0
        %v1469 = vmax.f32 %v1465, 0.0
        %v1470 = vld [vmem:[#allocation2] sm:$0xff]
        %v1471 = vld [vmem:[#allocation2 + $0x8] sm:$0xff]
        %v1472 = vadd.f32 %v1470, %v1468
        %v1473 = vadd.f32 %v1471, %v1469
        %v1474 = vpack.c.bf16 %v1473, %v1472
        %v1476 = vunpack.c.l.b16 %v1474
        %v1477 = vunpack.c.h.b16 %v1474
        %v1478 = vpack.c.b16 %v1476, %v1476
        %v1479 = vpack.c.b16 %v1477, %v1477
        %1482 = vst [vmem:[%s340] sm:$0xf] %v1478
        %1483 = vst [vmem:[%s340 + $0x4] sm:$0xf] %v1479
        %s1484 = sand.u32 %s186, 1
        %s1485 = scalar_lea.sflag [#allocation5], %s1484
        %s1486 = sand.u32 %s186, 1
        %s1487 = smul.addr %s1486, 8
        %s1488 = scalar_lea.vmem [#allocation11], %s1487
        // Predicated region
        $region65: #{tpu_custom_call.1} parent=47 // pred_check
          %p1489 = pneg %p196
        $region66: #{tpu_custom_call.1} parent=47 // pred_check_branch
          %1491 = sbr.rel (%p1489) target = $region68
        $region67: #{tpu_custom_call.1} parent=47 // pred_region
          %s1492 = smul.u32 2, %s26
          %s1494 = ssub.s32 128, 128
          %1495 = vsyncadd %s1485, %s1494
          %s1496 = smul.addr %s1492, 64
          %s1497 = scalar_lea.hbm %s7, %s1496
          %s1498 = sshll.u32 %s1488, 4
          %s1499 = int_to_ptr.vmem [resolvable:$true] %s1498
          %1504 = dma.vmem_to_hbm [thread:$0]  %s1499, 128, %s1497, %s1485, 64, 64, 4
        $region68: #{tpu_custom_call.1} parent=47 // pred_fallthru
          _
      $region48: #{tpu_custom_call.1} parent=5 // pred_fallthru
        _
      %p1505 = scmp.le.s32.totalorder 2, %s21
      // Predicated region
      $region69: #{tpu_custom_call.1} parent=5 // pred_check
        %p1506 = pneg %p1505
      $region70: #{tpu_custom_call.1} parent=5 // pred_check_branch
        %1508 = sbr.rel (%p1506) target = $region72
      $region71: #{tpu_custom_call.1} parent=5 // pred_region
        %s1509 = ssub.s32 %s21, 2
        // Predicated region
        $region73: #{tpu_custom_call.1} parent=71 // pred_check
          %p1510 = pneg %p202
        $region74: #{tpu_custom_call.1} parent=71 // pred_check_branch
          %1512 = sbr.rel (%p1510) target = $region76
        $region75: #{tpu_custom_call.1} parent=71 // pred_region
          %s1513 = sand.u32 %s187, 1
          %s1514 = scalar_lea.sflag [#allocation5], %s1513
          %s1515 = sand.u32 %s187, 1
          %s1516 = smul.addr %s1515, 8
          %s1517 = scalar_lea.vmem [#allocation11], %s1516
          %1518 = dma.done %s1514, 128
        $region76: #{tpu_custom_call.1} parent=71 // pred_fallthru
          _
      $region72: #{tpu_custom_call.1} parent=5 // pred_fallthru
        _
    $region6: #{tpu_custom_call.1} parent=1 // loop_footer
      %s25 = sadd.s32 1, %s21
    $region7: #{tpu_custom_call.1} parent=1 // loop_footer_branch
      %20 = sbr.rel target = $region3
    $region8: #{tpu_custom_call.1} parent=1 // loop_exit
      _
    %1519 = vsyncpa [#allocation4], 1
    %s1520 = scalar_lea.sflag [#allocation4], 1
    %1521 = vsyncpa %s1520, 1
    %1522 = vsyncpa [#allocation7], 1
    %1523 = vsyncpa [#allocation10], 1
    %1524 = vsyncpa [#allocation5], 1
    %s1525 = scalar_lea.sflag [#allocation5], 1
    %1526 = vsyncpa %s1525, 1

</llo_original>
